<compile_context>
chip_gen: v7x
topology: tpu7x:2x2x1
jax: 0.10.0
libtpu: 0.0.40
codegen_flags: <defaults>
</compile_context>

<pallas_src>
import functools
import math

import jax
import jax.numpy as jnp
from jax.experimental import pallas as pl
from jax.experimental.pallas import tpu as pltpu


# ----------------------------- in-kernel math helpers -----------------------------

def _layer_norm(x, w, b, eps=1e-5):
    # PyTorch nn.LayerNorm: biased variance, eps=1e-5 (TransformerEncoderLayer default).
    mu = jnp.mean(x, axis=-1, keepdims=True)
    xc = x - mu
    var = jnp.mean(xc * xc, axis=-1, keepdims=True)
    return xc * jax.lax.rsqrt(var + eps) * w + b


_SQRT1_2 = 0.7071067811865476


def _erf_f32(x):
    # Abramowitz & Stegun 7.1.26 rational approximation, |err| < 1.5e-7.
    # Division moved to the EUP slot via pl.reciprocal(approx=True).
    p = 0.3275911
    a1, a2, a3, a4, a5 = 0.254829592, -0.284496736, 1.421413741, -1.453152027, 1.061405429
    ax = jnp.abs(x)
    t = pl.reciprocal(1.0 + p * ax, approx=True)
    poly = ((((a5 * t + a4) * t + a3) * t + a2) * t + a1) * t
    y = 1.0 - poly * jnp.exp(-ax * ax)
    return jnp.where(x < 0.0, -y, y)


def _gelu_exact(x):
    # PyTorch activation='gelu' is the exact erf form.
    return 0.5 * x * (1.0 + _erf_f32(x * _SQRT1_2))


# ----------------------------- kernels -----------------------------

def _attn_block_kernel(x_ref, bias_ref, ln_w_ref, ln_b_ref,
                       wq_ref, wk_ref, wv_ref, bq_ref, bk_ref, bv_ref,
                       wo_ref, bo_ref,
                       o_ref, ctx_ref, *, nh, bt, S, scale):
    """LN1 + full-width Q/K/V projections + per-head masked attention + Wo + residual.

    Everything stays in VMEM for one batch tile; the context of each head is written into its lane
    slice of a (rows, E) scratch so the Wo matmul and the output store are lane-dense.
    """
    E = x_ref.shape[-1]
    hd = E // nh
    x = x_ref[...]                                                       # (rows, E) f32
    h = _layer_norm(x, ln_w_ref[...], ln_b_ref[...]).astype(jnp.bfloat16)
    # Full-width projections: M = bt*S rows, K = N = E -> MXU-efficient, lane-dense.
    q = (jnp.dot(h, wq_ref[...], preferred_element_type=jnp.float32) + bq_ref[...]) * scale
    k = jnp.dot(h, wk_ref[...], preferred_element_type=jnp.float32) + bk_ref[...]
    v = jnp.dot(h, wv_ref[...], preferred_element_type=jnp.float32) + bv_ref[...]
    q = q.astype(jnp.bfloat16)
    k = k.astype(jnp.bfloat16)
    v = v.astype(jnp.bfloat16)
    bias = bias_ref[...]                                                 # (bt, 1, S) f32

    # Per-head attention entirely in VMEM (no HBM round trips, no XLA transposes).
    # The head matmuls contract over hd < 128 and are not MXU-critical.
    # TODO(synk): for very long S, KV-tile this loop flash-style (online softmax with m/l/acc
    # scratch) so the (bt, S, S) logits never materialize in full.
    for hh in range(nh):
        sl = slice(hh * hd, (hh + 1) * hd)
        qh = q[:, sl].reshape(bt, S, hd)
        kh = k[:, sl].reshape(bt, S, hd)
        vh = v[:, sl].reshape(bt, S, hd)
        s = jnp.einsum('bqd,bkd->bqk', qh, kh, preferred_element_type=jnp.float32)
        s = s + bias                                                     # key-padding bias
        m = jnp.max(s, axis=-1, keepdims=True)
        pe = jnp.exp(s - m)
        denom = jnp.sum(pe, axis=-1, keepdims=True)
        pw = (pe * pl.reciprocal(denom, approx=True)).astype(jnp.bfloat16)
        ch = jnp.einsum('bqk,bkd->bqd', pw, vh, preferred_element_type=jnp.float32)
        ctx_ref[:, sl] = ch.reshape(bt * S, hd).astype(jnp.bfloat16)

    attn = jnp.dot(ctx_ref[...], wo_ref[...], preferred_element_type=jnp.float32) + bo_ref[...]
    o_ref[...] = x + attn                                                # residual 1 (dropout = id)


def _ffn_block_kernel(x_ref, ln_w_ref, ln_b_ref,
                      w1_ref, b1_ref, w2_ref, b2_ref,
                      o_ref, h_ref, acc_ref):
    """Pre-norm GELU FFN, K-tiled over H blocks (grid axis 1, 'arbitrary'), plus residual."""
    j = pl.program_id(1)

    @pl.when(j == 0)
    def _():
        h_ref[...] = _layer_norm(x_ref[...], ln_w_ref[...], ln_b_ref[...]).astype(jnp.bfloat16)
        acc_ref[...] = jnp.zeros_like(acc_ref)

    ff = jnp.dot(h_ref[...], w1_ref[...], preferred_element_type=jnp.float32) + b1_ref[...]
    ff = _gelu_exact(ff).astype(jnp.bfloat16)
    acc_ref[...] += jnp.dot(ff, w2_ref[...], preferred_element_type=jnp.float32)

    @pl.when(j == pl.num_programs(1) - 1)
    def _():
        o_ref[...] = x_ref[...] + acc_ref[...] + b2_ref[...]             # residual 2


# ----------------------------- pallas_call plumbing -----------------------------

def _full_spec(a):
    # Whole-array block, constant index -> weight stays resident in VMEM across the grid.
    # TODO(synk): add pipeline_mode=pl.Buffered(1) to pin constant-index weight blocks to a single
    # buffer (halves weight VMEM on v7x) once single-buffer pinning is supported everywhere.
    nd = a.ndim
    return pl.BlockSpec(a.shape, lambda *_, _n=nd: (0,) * _n)


def _vmem_budget_bytes():
    """Generation-aware usable VMEM (~80% of physical: 128 MiB on v5e/v6e, 64 MiB on v7x)."""
    cap = 64 << 20                                   # conservative default (v7x per-core VMEM)
    try:
        info = pltpu.get_tpu_info()
        cap = int(getattr(info, "vmem_capacity_bytes", cap))
    except Exception:
        pass
    return max(32 << 20, int(cap * 0.80))            # headroom for Mosaic internal scratch / sems


def _cparams(dims, vmem_hint_bytes, budget):
    limit = int(min(budget, max(32 << 20, int(1.5 * vmem_hint_bytes))))
    return pltpu.CompilerParams(dimension_semantics=dims, vmem_limit_bytes=limit)


def _pick_batch_tile(B, S, *, per_row_bytes, fixed_bytes, budget, target_rows):
    """Largest divisor bt of B whose footprint fits the budget, targeting `target_rows` rows."""
    cands = []
    for bt in range(1, B + 1):
        if B % bt:
            continue
        rows = bt * S
        if rows % 8 != 0 and bt != B:                # (8,128) sublane constraint on (rows, E) blocks
            continue
        cands.append(bt)
    if not cands:
        cands = [B]
    fits = [bt for bt in cands if fixed_bytes + bt * S * per_row_bytes <= budget] or [min(cands)]
    under = [bt for bt in fits if bt * S <= target_rows]
    bt = max(under) if under else min(fits)
    # Megacore (v7x): prefer >=2 grid blocks so the "parallel" axis can shard across TensorCores,
    # but only if each block still keeps >=256 matmul rows.
    if B // bt < 2:
        alts = [b2 for b2 in fits if b2 < bt and B // b2 >= 2 and b2 * S >= 256]
        if alts:
            bt = max(alts)
    return bt


def _pick_h_block(H, E, rows_guess, budget):
    """Largest 128-multiple divisor of H whose weight blocks + (rows, Hb) intermediate fit."""
    if H <= 128 or H % 128 != 0:
        return H
    cands = [d for d in range(128, H + 1, 128) if H % d == 0]
    best = cands[0]
    for hb in cands:
        w_bytes = 2 * 2 * (2 * E * hb)               # w1+w2 blocks, bf16, double-buffered
        inter = rows_guess * hb * 6                  # (rows, Hb) f32 pre-act + bf16 gelu copy
        if w_bytes + inter <= budget // 2:           # keep half the budget for the (rows, E) slabs
            best = hb
    return best


def transformer_encoder_layer(x2d, bias_b1s, p, *, B, S, nh, bt_a, bt_f, hb, budget):
    """One pre-LN TransformerEncoderLayer. x2d: (B*S, E) f32, bias_b1s: (B, 1, S) f32."""
    R, E = x2d.shape
    H = p["w1"].shape[1]
    hd = E // nh
    f32 = jnp.float32

    # ---------- (A) LN1 + QKV + multi-head masked attention + Wo + residual ----------
    rows_a = bt_a * S
    nblk_a = B // bt_a
    act_a = pl.BlockSpec((rows_a, E), lambda b: (b, 0))
    bias_spec = pl.BlockSpec((bt_a, 1, S), lambda b: (b, 0, 0))
    attn_w = [p[n] for n in ("ln1_w", "ln1_b", "wq", "wk", "wv", "bq", "bk", "bv", "wo", "bo")]
    hint_a = 16 * E * E + rows_a * E * 26 + 4 * bt_a * S * S * 4 + (2 << 20)
    x1 = pl.pallas_call(
        functools.partial(_attn_block_kernel, nh=nh, bt=bt_a, S=S, scale=1.0 / math.sqrt(hd)),
        out_shape=jax.ShapeDtypeStruct((R, E), f32),
        grid_spec=pltpu.PrefetchScalarGridSpec(
            num_scalar_prefetch=0, grid=(nblk_a,),
            in_specs=[act_a, bias_spec] + [_full_spec(w) for w in attn_w],
            out_specs=act_a,
            scratch_shapes=[pltpu.VMEM((rows_a, E), jnp.bfloat16)]),
        compiler_params=_cparams(("parallel",), hint_a, budget),
        cost_estimate=pl.CostEstimate(
            flops=int(8 * R * E * E + 4 * B * S * S * E),
            transcendentals=int(B * nh * S * S + R),
            bytes_accessed=int(2 * R * E * 4 + 4 * E * E * 2 + B * S * 4)),
    )(x2d, bias_b1s, *attn_w)

    # ---------- (B) LN2 + GELU FFN (H-tiled) + residual ----------
    rows_f = bt_f * S
    nblk_f = B // bt_f
    n_h = H // hb
    act_f = pl.BlockSpec((rows_f, E), lambda b, j: (b, 0))
    hint_f = 8 * E * hb + rows_f * (E * 22 + hb * 6) + (2 << 20)
    out = pl.pallas_call(
        _ffn_block_kernel,
        out_shape=jax.ShapeDtypeStruct((R, E), f32),
        grid_spec=pltpu.PrefetchScalarGridSpec(
            num_scalar_prefetch=0, grid=(nblk_f, n_h),
            in_specs=[act_f,
                      _full_spec(p["ln2_w"]), _full_spec(p["ln2_b"]),
                      pl.BlockSpec((E, hb), lambda b, j: (0, j)),
                      pl.BlockSpec((1, hb), lambda b, j: (0, j)),
                      pl.BlockSpec((hb, E), lambda b, j: (j, 0)),
                      _full_spec(p["b2"])],
            out_specs=act_f,
            scratch_shapes=[pltpu.VMEM((rows_f, E), jnp.bfloat16),
                            pltpu.VMEM((rows_f, E), jnp.float32)]),
        compiler_params=_cparams(("parallel", "arbitrary"), hint_f, budget),
        cost_estimate=pl.CostEstimate(
            flops=int(4 * R * E * H),
            transcendentals=int(R * H),
            bytes_accessed=int(2 * R * E * 4 + 4 * E * H * 2)),
    )(x1, p["ln2_w"], p["ln2_b"], p["w1"], p["b1"], p["w2"], p["b2"])
    return out


# ----------------------------- model wrapper -----------------------------

def init_bert_params(key, *, vocab_size, max_length, embedding_size, hidden_size, n_layers):
    E, H = embedding_size, hidden_size
    ks = jax.random.split(key, 2 + n_layers)

    def w(k, shape):  # matmul weights live in bf16 (MXU operand dtype)
        return (0.02 * jax.random.normal(k, shape, jnp.float32)).astype(jnp.bfloat16)

    params = {
        "tok_emb": 0.02 * jax.random.normal(ks[0], (vocab_size, E), jnp.float32),
        "pos_emb": 0.02 * jax.random.normal(ks[1], (max_length, E), jnp.float32),
        "layers": [],
    }
    for li in range(n_layers):
        lk = jax.random.split(ks[2 + li], 8)
        params["layers"].append({
            "ln1_w": jnp.ones((1, E), jnp.float32), "ln1_b": jnp.zeros((1, E), jnp.float32),
            "wq": w(lk[0], (E, E)), "wk": w(lk[1], (E, E)), "wv": w(lk[2], (E, E)),
            "bq": 0.02 * jax.random.normal(lk[3], (1, E), jnp.float32),
            "bk": jnp.zeros((1, E), jnp.float32),
            "bv": jnp.zeros((1, E), jnp.float32),
            "wo": w(lk[4], (E, E)), "bo": jnp.zeros((1, E), jnp.float32),
            "ln2_w": jnp.ones((1, E), jnp.float32), "ln2_b": jnp.zeros((1, E), jnp.float32),
            "w1": w(lk[5], (E, H)), "b1": 0.02 * jax.random.normal(lk[6], (1, H), jnp.float32),
            "w2": w(lk[7], (H, E)), "b2": jnp.zeros((1, E), jnp.float32),
        })
    return params


def bert_forward(params, token_ids, *, attention_heads):
    """Equivalent of BERT.forward(x) with segment_label=None, time_info=None (eval mode)."""
    B, S = token_ids.shape
    E = params["tok_emb"].shape[1]
    H = params["layers"][0]["w1"].shape[1]
    nh = attention_heads

    budget = _vmem_budget_bytes()
    target_rows = 1024 if budget > (80 << 20) else 512

    # Per-kernel batch tiles: the attention block carries (bt,S,S) logits + q/k/v/ctx slabs, the
    # FFN block carries a (rows,Hb) intermediate + the (rows,E) f32 accumulator.
    bt_a = _pick_batch_tile(B, S, per_row_bytes=E * 26 + 16 * S,
                            fixed_bytes=16 * E * E + (2 << 20),
                            budget=budget, target_rows=target_rows)
    hb = _pick_h_block(H, E, rows_guess=min(B * S, target_rows), budget=budget)
    bt_f = _pick_batch_tile(B, S, per_row_bytes=E * 22 + hb * 6,
                            fixed_bytes=8 * E * hb + (2 << 20),
                            budget=budget, target_rows=target_rows)

    # mask = (x == 0) -> additive key-padding bias, kept at (B,1,S) and broadcast across heads
    # inside the kernel. Large-finite (not -inf) so fully-padded rows stay finite instead of NaN.
    bias_b1s = jnp.where(token_ids == 0, jnp.float32(-1e30), jnp.float32(0.0))[:, None, :]

    # BERTEmbedding: token embedding + learned positional embedding (dropout = identity).
    # TODO(synk): segment / temporal embedding terms skipped (forward inputs are None).
    x = params["tok_emb"][token_ids] + params["pos_emb"][:S][None, :, :]
    x2d = x.reshape(B * S, E)

    for lp in params["layers"]:
        x2d = transformer_encoder_layer(x2d, bias_b1s, lp, B=B, S=S, nh=nh,
                                        bt_a=bt_a, bt_f=bt_f, hb=hb, budget=budget)
    return x2d.reshape(B, S, E)


# ----------------------------- demo -----------------------------

if __name__ == "__main__":
    cfg = dict(vocab_size=100, max_length=16, hidden_size=64, embedding_size=32,
               n_layers=2, attention_heads=4, dropout=0.1,
               uses_temporal=False, learned_positional=True)
    B, S = 2, 8

    key = jax.random.PRNGKey(0)
    k_tok, k_par = jax.random.split(key)

    token_ids = jax.random.randint(k_tok, (B, S), 1, cfg["vocab_size"], dtype=jnp.int32)
    token_ids = token_ids.at[:, S - 2:].set(0)   # padding positions -> exercise the mask

    params = init_bert_params(
        k_par,
        vocab_size=cfg["vocab_size"], max_length=cfg["max_length"],
        embedding_size=cfg["embedding_size"], hidden_size=cfg["hidden_size"],
        n_layers=cfg["n_layers"],
    )

    fwd = jax.jit(functools.partial(bert_forward, attention_heads=cfg["attention_heads"]))
    out = fwd(params, token_ids)
    out = jax.block_until_ready(out)

    assert out.shape == (B, S, cfg["embedding_size"])
    assert bool(jnp.all(jnp.isfinite(out)))
    print("KERNEL_OK")
</pallas_src>

<mosaic_0001>
module attributes {stable_mosaic.version = 11 : i64} {
  func.func @_attn_block_kernel(%arg0: i32, %arg1: memref<16x32xf32, #tpu.memory_space<vmem>>, %arg2: memref<2x1x8xf32, #tpu.memory_space<vmem>>, %arg3: memref<1x32xf32, #tpu.memory_space<vmem>>, %arg4: memref<1x32xf32, #tpu.memory_space<vmem>>, %arg5: memref<32x32xbf16, #tpu.memory_space<vmem>>, %arg6: memref<32x32xbf16, #tpu.memory_space<vmem>>, %arg7: memref<32x32xbf16, #tpu.memory_space<vmem>>, %arg8: memref<1x32xf32, #tpu.memory_space<vmem>>, %arg9: memref<1x32xf32, #tpu.memory_space<vmem>>, %arg10: memref<1x32xf32, #tpu.memory_space<vmem>>, %arg11: memref<32x32xbf16, #tpu.memory_space<vmem>>, %arg12: memref<1x32xf32, #tpu.memory_space<vmem>>, %arg13: memref<16x32xf32, #tpu.memory_space<vmem>>, %arg14: memref<16x32xbf16, #tpu.memory_space<vmem>>) attributes {dimension_semantics = [#tpu.dimension_semantics<parallel>], iteration_bounds = array<i64: 1>, scalar_prefetch = 0 : i64, scratch_operands = 1 : i64, tpu.core_type = #tpu.core_type<tc>, window_params = [{transform_indices = @transform_0, window_bounds = array<i64: 16, 32>}, {transform_indices = @transform_1, window_bounds = array<i64: 2, 1, 8>}, {pipeline_mode = #tpu.pipeline_mode<synchronous>, transform_indices = @transform_2, window_bounds = array<i64: 1, 32>}, {pipeline_mode = #tpu.pipeline_mode<synchronous>, transform_indices = @transform_3, window_bounds = array<i64: 1, 32>}, {pipeline_mode = #tpu.pipeline_mode<synchronous>, transform_indices = @transform_4, window_bounds = array<i64: 32, 32>}, {pipeline_mode = #tpu.pipeline_mode<synchronous>, transform_indices = @transform_5, window_bounds = array<i64: 32, 32>}, {pipeline_mode = #tpu.pipeline_mode<synchronous>, transform_indices = @transform_6, window_bounds = array<i64: 32, 32>}, {pipeline_mode = #tpu.pipeline_mode<synchronous>, transform_indices = @transform_7, window_bounds = array<i64: 1, 32>}, {pipeline_mode = #tpu.pipeline_mode<synchronous>, transform_indices = @transform_8, window_bounds = array<i64: 1, 32>}, {pipeline_mode = #tpu.pipeline_mode<synchronous>, transform_indices = @transform_9, window_bounds = array<i64: 1, 32>}, {pipeline_mode = #tpu.pipeline_mode<synchronous>, transform_indices = @transform_10, window_bounds = array<i64: 32, 32>}, {pipeline_mode = #tpu.pipeline_mode<synchronous>, transform_indices = @transform_11, window_bounds = array<i64: 1, 32>}, {transform_indices = @transform_12, window_bounds = array<i64: 16, 32>}]} {
    %c0 = arith.constant 0 : index
    %c0_0 = arith.constant 0 : index
    %0 = vector.load %arg1[%c0, %c0_0] : memref<16x32xf32, #tpu.memory_space<vmem>>, vector<16x32xf32>
    %c0_1 = arith.constant 0 : index
    %c0_2 = arith.constant 0 : index
    %1 = vector.load %arg3[%c0_1, %c0_2] : memref<1x32xf32, #tpu.memory_space<vmem>>, vector<1x32xf32>
    %c0_3 = arith.constant 0 : index
    %c0_4 = arith.constant 0 : index
    %2 = vector.load %arg4[%c0_3, %c0_4] : memref<1x32xf32, #tpu.memory_space<vmem>>, vector<1x32xf32>
    %cst = arith.constant dense<0.000000e+00> : vector<16xf32>
    %3 = vector.multi_reduction <add>, %0, %cst [1] : vector<16x32xf32> to vector<16xf32>
    %4 = vector.shape_cast %3 : vector<16xf32> to vector<16x1xf32>
    %cst_5 = arith.constant 3.200000e+01 : f32
    %5 = vector.broadcast %cst_5 : f32 to vector<16x1xf32>
    %6 = arith.divf %4, %5 : vector<16x1xf32>
    %7 = vector.broadcast %6 : vector<16x1xf32> to vector<16x32xf32>
    %8 = arith.subf %0, %7 : vector<16x32xf32>
    %9 = arith.mulf %8, %8 : vector<16x32xf32>
    %cst_6 = arith.constant dense<0.000000e+00> : vector<16xf32>
    %10 = vector.multi_reduction <add>, %9, %cst_6 [1] : vector<16x32xf32> to vector<16xf32>
    %11 = vector.shape_cast %10 : vector<16xf32> to vector<16x1xf32>
    %cst_7 = arith.constant 3.200000e+01 : f32
    %12 = vector.broadcast %cst_7 : f32 to vector<16x1xf32>
    %13 = arith.divf %11, %12 : vector<16x1xf32>
    %cst_8 = arith.constant 9.99999974E-6 : f32
    %14 = vector.broadcast %cst_8 : f32 to vector<16x1xf32>
    %15 = arith.addf %13, %14 : vector<16x1xf32>
    %16 = math.rsqrt %15 : vector<16x1xf32>
    %17 = vector.broadcast %16 : vector<16x1xf32> to vector<16x32xf32>
    %18 = arith.mulf %8, %17 : vector<16x32xf32>
    %19 = vector.broadcast %1 : vector<1x32xf32> to vector<16x32xf32>
    %20 = arith.mulf %18, %19 : vector<16x32xf32>
    %21 = vector.broadcast %2 : vector<1x32xf32> to vector<16x32xf32>
    %22 = arith.addf %20, %21 : vector<16x32xf32>
    %23 = arith.truncf %22 : vector<16x32xf32> to vector<16x32xbf16>
    %c0_9 = arith.constant 0 : index
    %c0_10 = arith.constant 0 : index
    %24 = vector.load %arg5[%c0_9, %c0_10] : memref<32x32xbf16, #tpu.memory_space<vmem>>, vector<32x32xbf16>
    %cst_11 = arith.constant dense<0.000000e+00> : vector<16x32xf32>
    %25 = tpu.matmul %23, %24, %cst_11 {dimension_numbers = #tpu.dot_dimension_numbers<[1], [0], [0], [1], [0, 0, 1, 1], [], []>} : vector<16x32xbf16>, vector<32x32xbf16>, vector<16x32xf32> -> vector<16x32xf32>
    %c0_12 = arith.constant 0 : index
    %c0_13 = arith.constant 0 : index
    %26 = vector.load %arg8[%c0_12, %c0_13] : memref<1x32xf32, #tpu.memory_space<vmem>>, vector<1x32xf32>
    %27 = vector.broadcast %26 : vector<1x32xf32> to vector<16x32xf32>
    %28 = arith.addf %25, %27 : vector<16x32xf32>
    %cst_14 = arith.constant 0.353553385 : f32
    %29 = vector.broadcast %cst_14 : f32 to vector<16x32xf32>
    %30 = arith.mulf %28, %29 : vector<16x32xf32>
    %c0_15 = arith.constant 0 : index
    %c0_16 = arith.constant 0 : index
    %31 = vector.load %arg6[%c0_15, %c0_16] : memref<32x32xbf16, #tpu.memory_space<vmem>>, vector<32x32xbf16>
    %cst_17 = arith.constant dense<0.000000e+00> : vector<16x32xf32>
    %32 = tpu.matmul %23, %31, %cst_17 {dimension_numbers = #tpu.dot_dimension_numbers<[1], [0], [0], [1], [0, 0, 1, 1], [], []>} : vector<16x32xbf16>, vector<32x32xbf16>, vector<16x32xf32> -> vector<16x32xf32>
    %c0_18 = arith.constant 0 : index
    %c0_19 = arith.constant 0 : index
    %33 = vector.load %arg9[%c0_18, %c0_19] : memref<1x32xf32, #tpu.memory_space<vmem>>, vector<1x32xf32>
    %34 = vector.broadcast %33 : vector<1x32xf32> to vector<16x32xf32>
    %35 = arith.addf %32, %34 : vector<16x32xf32>
    %c0_20 = arith.constant 0 : index
    %c0_21 = arith.constant 0 : index
    %36 = vector.load %arg7[%c0_20, %c0_21] : memref<32x32xbf16, #tpu.memory_space<vmem>>, vector<32x32xbf16>
    %cst_22 = arith.constant dense<0.000000e+00> : vector<16x32xf32>
    %37 = tpu.matmul %23, %36, %cst_22 {dimension_numbers = #tpu.dot_dimension_numbers<[1], [0], [0], [1], [0, 0, 1, 1], [], []>} : vector<16x32xbf16>, vector<32x32xbf16>, vector<16x32xf32> -> vector<16x32xf32>
    %c0_23 = arith.constant 0 : index
    %c0_24 = arith.constant 0 : index
    %38 = vector.load %arg10[%c0_23, %c0_24] : memref<1x32xf32, #tpu.memory_space<vmem>>, vector<1x32xf32>
    %39 = vector.broadcast %38 : vector<1x32xf32> to vector<16x32xf32>
    %40 = arith.addf %37, %39 : vector<16x32xf32>
    %41 = arith.truncf %30 : vector<16x32xf32> to vector<16x32xbf16>
    %42 = arith.truncf %35 : vector<16x32xf32> to vector<16x32xbf16>
    %43 = arith.truncf %40 : vector<16x32xf32> to vector<16x32xbf16>
    %c0_25 = arith.constant 0 : index
    %c0_26 = arith.constant 0 : index
    %c0_27 = arith.constant 0 : index
    %44 = vector.load %arg2[%c0_25, %c0_26, %c0_27] : memref<2x1x8xf32, #tpu.memory_space<vmem>>, vector<2x1x8xf32>
    %45 = vector.extract_strided_slice %41 {offsets = [0, 0], sizes = [16, 8], strides = [1, 1]} : vector<16x32xbf16> to vector<16x8xbf16>
    %46 = vector.shape_cast %45 : vector<16x8xbf16> to vector<2x8x8xbf16>
    %47 = vector.extract_strided_slice %42 {offsets = [0, 0], sizes = [16, 8], strides = [1, 1]} : vector<16x32xbf16> to vector<16x8xbf16>
    %48 = vector.shape_cast %47 : vector<16x8xbf16> to vector<2x8x8xbf16>
    %49 = vector.extract_strided_slice %43 {offsets = [0, 0], sizes = [16, 8], strides = [1, 1]} : vector<16x32xbf16> to vector<16x8xbf16>
    %50 = vector.shape_cast %49 : vector<16x8xbf16> to vector<2x8x8xbf16>
    "tpu.trace_start"() <{level = 10 : i32, message = "bqd,bkd->bqk"}> : () -> ()
    %cst_28 = arith.constant dense<0.000000e+00> : vector<2x8x8xf32>
    %51 = tpu.matmul %46, %48, %cst_28 {dimension_numbers = #tpu.dot_dimension_numbers<[2], [2], [1], [1], [0, 0, 0, 1, 1, 1], [0], [0]>} : vector<2x8x8xbf16>, vector<2x8x8xbf16>, vector<2x8x8xf32> -> vector<2x8x8xf32>
    "tpu.trace_stop"() : () -> ()
    %52 = vector.broadcast %44 : vector<2x1x8xf32> to vector<2x8x8xf32>
    %53 = arith.addf %51, %52 : vector<2x8x8xf32>
    %cst_29 = arith.constant dense<0xFF800000> : vector<2x8xf32>
    %54 = vector.multi_reduction <maximumf>, %53, %cst_29 [2] : vector<2x8x8xf32> to vector<2x8xf32>
    %55 = vector.shape_cast %54 : vector<2x8xf32> to vector<2x8x1xf32>
    %56 = vector.broadcast %55 : vector<2x8x1xf32> to vector<2x8x8xf32>
    %57 = arith.subf %53, %56 : vector<2x8x8xf32>
    %58 = math.exp %57 : vector<2x8x8xf32>
    %cst_30 = arith.constant dense<0.000000e+00> : vector<2x8xf32>
    %59 = vector.multi_reduction <add>, %58, %cst_30 [2] : vector<2x8x8xf32> to vector<2x8xf32>
    %60 = vector.shape_cast %59 : vector<2x8xf32> to vector<2x8x1xf32>
    %61 = tpu.reciprocal %60 {approx = true} : vector<2x8x1xf32> -> vector<2x8x1xf32>
    %62 = vector.broadcast %61 : vector<2x8x1xf32> to vector<2x8x8xf32>
    %63 = arith.mulf %58, %62 : vector<2x8x8xf32>
    %64 = arith.truncf %63 : vector<2x8x8xf32> to vector<2x8x8xbf16>
    "tpu.trace_start"() <{level = 10 : i32, message = "bqk,bkd->bqd"}> : () -> ()
    %cst_31 = arith.constant dense<0.000000e+00> : vector<2x8x8xf32>
    %65 = tpu.matmul %64, %50, %cst_31 {dimension_numbers = #tpu.dot_dimension_numbers<[2], [1], [1], [2], [0, 0, 0, 1, 1, 2], [0], [0]>} : vector<2x8x8xbf16>, vector<2x8x8xbf16>, vector<2x8x8xf32> -> vector<2x8x8xf32>
    "tpu.trace_stop"() : () -> ()
    %66 = vector.shape_cast %65 : vector<2x8x8xf32> to vector<16x8xf32>
    %67 = arith.truncf %66 : vector<16x8xf32> to vector<16x8xbf16>
    %c0_32 = arith.constant 0 : index
    %c0_33 = arith.constant 0 : index
    %68 = vector.load %arg14[%c0_32, %c0_33] : memref<16x32xbf16, #tpu.memory_space<vmem>>, vector<16x8xbf16>
    tpu.vector_store %arg14[%c0_32, %c0_33], %67 {strides = array<i32>} : memref<16x32xbf16, #tpu.memory_space<vmem>>, vector<16x8xbf16>,
    %69 = vector.extract_strided_slice %41 {offsets = [0, 8], sizes = [16, 8], strides = [1, 1]} : vector<16x32xbf16> to vector<16x8xbf16>
    %70 = vector.shape_cast %69 : vector<16x8xbf16> to vector<2x8x8xbf16>
    %71 = vector.extract_strided_slice %42 {offsets = [0, 8], sizes = [16, 8], strides = [1, 1]} : vector<16x32xbf16> to vector<16x8xbf16>
    %72 = vector.shape_cast %71 : vector<16x8xbf16> to vector<2x8x8xbf16>
    %73 = vector.extract_strided_slice %43 {offsets = [0, 8], sizes = [16, 8], strides = [1, 1]} : vector<16x32xbf16> to vector<16x8xbf16>
    %74 = vector.shape_cast %73 : vector<16x8xbf16> to vector<2x8x8xbf16>
    "tpu.trace_start"() <{level = 10 : i32, message = "bqd,bkd->bqk"}> : () -> ()
    %cst_34 = arith.constant dense<0.000000e+00> : vector<2x8x8xf32>
    %75 = tpu.matmul %70, %72, %cst_34 {dimension_numbers = #tpu.dot_dimension_numbers<[2], [2], [1], [1], [0, 0, 0, 1, 1, 1], [0], [0]>} : vector<2x8x8xbf16>, vector<2x8x8xbf16>, vector<2x8x8xf32> -> vector<2x8x8xf32>
    "tpu.trace_stop"() : () -> ()
    %76 = vector.broadcast %44 : vector<2x1x8xf32> to vector<2x8x8xf32>
    %77 = arith.addf %75, %76 : vector<2x8x8xf32>
    %cst_35 = arith.constant dense<0xFF800000> : vector<2x8xf32>
    %78 = vector.multi_reduction <maximumf>, %77, %cst_35 [2] : vector<2x8x8xf32> to vector<2x8xf32>
    %79 = vector.shape_cast %78 : vector<2x8xf32> to vector<2x8x1xf32>
    %80 = vector.broadcast %79 : vector<2x8x1xf32> to vector<2x8x8xf32>
    %81 = arith.subf %77, %80 : vector<2x8x8xf32>
    %82 = math.exp %81 : vector<2x8x8xf32>
    %cst_36 = arith.constant dense<0.000000e+00> : vector<2x8xf32>
    %83 = vector.multi_reduction <add>, %82, %cst_36 [2] : vector<2x8x8xf32> to vector<2x8xf32>
    %84 = vector.shape_cast %83 : vector<2x8xf32> to vector<2x8x1xf32>
    %85 = tpu.reciprocal %84 {approx = true} : vector<2x8x1xf32> -> vector<2x8x1xf32>
    %86 = vector.broadcast %85 : vector<2x8x1xf32> to vector<2x8x8xf32>
    %87 = arith.mulf %82, %86 : vector<2x8x8xf32>
    %88 = arith.truncf %87 : vector<2x8x8xf32> to vector<2x8x8xbf16>
    "tpu.trace_start"() <{level = 10 : i32, message = "bqk,bkd->bqd"}> : () -> ()
    %cst_37 = arith.constant dense<0.000000e+00> : vector<2x8x8xf32>
    %89 = tpu.matmul %88, %74, %cst_37 {dimension_numbers = #tpu.dot_dimension_numbers<[2], [1], [1], [2], [0, 0, 0, 1, 1, 2], [0], [0]>} : vector<2x8x8xbf16>, vector<2x8x8xbf16>, vector<2x8x8xf32> -> vector<2x8x8xf32>
    "tpu.trace_stop"() : () -> ()
    %90 = vector.shape_cast %89 : vector<2x8x8xf32> to vector<16x8xf32>
    %91 = arith.truncf %90 : vector<16x8xf32> to vector<16x8xbf16>
    %c0_38 = arith.constant 0 : index
    %c8 = arith.constant 8 : index
    %92 = vector.load %arg14[%c0_38, %c8] : memref<16x32xbf16, #tpu.memory_space<vmem>>, vector<16x8xbf16>
    tpu.vector_store %arg14[%c0_38, %c8], %91 {strides = array<i32>} : memref<16x32xbf16, #tpu.memory_space<vmem>>, vector<16x8xbf16>,
    %93 = vector.extract_strided_slice %41 {offsets = [0, 16], sizes = [16, 8], strides = [1, 1]} : vector<16x32xbf16> to vector<16x8xbf16>
    %94 = vector.shape_cast %93 : vector<16x8xbf16> to vector<2x8x8xbf16>
    %95 = vector.extract_strided_slice %42 {offsets = [0, 16], sizes = [16, 8], strides = [1, 1]} : vector<16x32xbf16> to vector<16x8xbf16>
    %96 = vector.shape_cast %95 : vector<16x8xbf16> to vector<2x8x8xbf16>
    %97 = vector.extract_strided_slice %43 {offsets = [0, 16], sizes = [16, 8], strides = [1, 1]} : vector<16x32xbf16> to vector<16x8xbf16>
    %98 = vector.shape_cast %97 : vector<16x8xbf16> to vector<2x8x8xbf16>
    "tpu.trace_start"() <{level = 10 : i32, message = "bqd,bkd->bqk"}> : () -> ()
    %cst_39 = arith.constant dense<0.000000e+00> : vector<2x8x8xf32>
    %99 = tpu.matmul %94, %96, %cst_39 {dimension_numbers = #tpu.dot_dimension_numbers<[2], [2], [1], [1], [0, 0, 0, 1, 1, 1], [0], [0]>} : vector<2x8x8xbf16>, vector<2x8x8xbf16>, vector<2x8x8xf32> -> vector<2x8x8xf32>
    "tpu.trace_stop"() : () -> ()
    %100 = vector.broadcast %44 : vector<2x1x8xf32> to vector<2x8x8xf32>
    %101 = arith.addf %99, %100 : vector<2x8x8xf32>
    %cst_40 = arith.constant dense<0xFF800000> : vector<2x8xf32>
    %102 = vector.multi_reduction <maximumf>, %101, %cst_40 [2] : vector<2x8x8xf32> to vector<2x8xf32>
    %103 = vector.shape_cast %102 : vector<2x8xf32> to vector<2x8x1xf32>
    %104 = vector.broadcast %103 : vector<2x8x1xf32> to vector<2x8x8xf32>
    %105 = arith.subf %101, %104 : vector<2x8x8xf32>
    %106 = math.exp %105 : vector<2x8x8xf32>
    %cst_41 = arith.constant dense<0.000000e+00> : vector<2x8xf32>
    %107 = vector.multi_reduction <add>, %106, %cst_41 [2] : vector<2x8x8xf32> to vector<2x8xf32>
    %108 = vector.shape_cast %107 : vector<2x8xf32> to vector<2x8x1xf32>
    %109 = tpu.reciprocal %108 {approx = true} : vector<2x8x1xf32> -> vector<2x8x1xf32>
    %110 = vector.broadcast %109 : vector<2x8x1xf32> to vector<2x8x8xf32>
    %111 = arith.mulf %106, %110 : vector<2x8x8xf32>
    %112 = arith.truncf %111 : vector<2x8x8xf32> to vector<2x8x8xbf16>
    "tpu.trace_start"() <{level = 10 : i32, message = "bqk,bkd->bqd"}> : () -> ()
    %cst_42 = arith.constant dense<0.000000e+00> : vector<2x8x8xf32>
    %113 = tpu.matmul %112, %98, %cst_42 {dimension_numbers = #tpu.dot_dimension_numbers<[2], [1], [1], [2], [0, 0, 0, 1, 1, 2], [0], [0]>} : vector<2x8x8xbf16>, vector<2x8x8xbf16>, vector<2x8x8xf32> -> vector<2x8x8xf32>
    "tpu.trace_stop"() : () -> ()
    %114 = vector.shape_cast %113 : vector<2x8x8xf32> to vector<16x8xf32>
    %115 = arith.truncf %114 : vector<16x8xf32> to vector<16x8xbf16>
    %c0_43 = arith.constant 0 : index
    %c16 = arith.constant 16 : index
    %116 = vector.load %arg14[%c0_43, %c16] : memref<16x32xbf16, #tpu.memory_space<vmem>>, vector<16x8xbf16>
    tpu.vector_store %arg14[%c0_43, %c16], %115 {strides = array<i32>} : memref<16x32xbf16, #tpu.memory_space<vmem>>, vector<16x8xbf16>,
    %117 = vector.extract_strided_slice %41 {offsets = [0, 24], sizes = [16, 8], strides = [1, 1]} : vector<16x32xbf16> to vector<16x8xbf16>
    %118 = vector.shape_cast %117 : vector<16x8xbf16> to vector<2x8x8xbf16>
    %119 = vector.extract_strided_slice %42 {offsets = [0, 24], sizes = [16, 8], strides = [1, 1]} : vector<16x32xbf16> to vector<16x8xbf16>
    %120 = vector.shape_cast %119 : vector<16x8xbf16> to vector<2x8x8xbf16>
    %121 = vector.extract_strided_slice %43 {offsets = [0, 24], sizes = [16, 8], strides = [1, 1]} : vector<16x32xbf16> to vector<16x8xbf16>
    %122 = vector.shape_cast %121 : vector<16x8xbf16> to vector<2x8x8xbf16>
    "tpu.trace_start"() <{level = 10 : i32, message = "bqd,bkd->bqk"}> : () -> ()
    %cst_44 = arith.constant dense<0.000000e+00> : vector<2x8x8xf32>
    %123 = tpu.matmul %118, %120, %cst_44 {dimension_numbers = #tpu.dot_dimension_numbers<[2], [2], [1], [1], [0, 0, 0, 1, 1, 1], [0], [0]>} : vector<2x8x8xbf16>, vector<2x8x8xbf16>, vector<2x8x8xf32> -> vector<2x8x8xf32>
    "tpu.trace_stop"() : () -> ()
    %124 = vector.broadcast %44 : vector<2x1x8xf32> to vector<2x8x8xf32>
    %125 = arith.addf %123, %124 : vector<2x8x8xf32>
    %cst_45 = arith.constant dense<0xFF800000> : vector<2x8xf32>
    %126 = vector.multi_reduction <maximumf>, %125, %cst_45 [2] : vector<2x8x8xf32> to vector<2x8xf32>
    %127 = vector.shape_cast %126 : vector<2x8xf32> to vector<2x8x1xf32>
    %128 = vector.broadcast %127 : vector<2x8x1xf32> to vector<2x8x8xf32>
    %129 = arith.subf %125, %128 : vector<2x8x8xf32>
    %130 = math.exp %129 : vector<2x8x8xf32>
    %cst_46 = arith.constant dense<0.000000e+00> : vector<2x8xf32>
    %131 = vector.multi_reduction <add>, %130, %cst_46 [2] : vector<2x8x8xf32> to vector<2x8xf32>
    %132 = vector.shape_cast %131 : vector<2x8xf32> to vector<2x8x1xf32>
    %133 = tpu.reciprocal %132 {approx = true} : vector<2x8x1xf32> -> vector<2x8x1xf32>
    %134 = vector.broadcast %133 : vector<2x8x1xf32> to vector<2x8x8xf32>
    %135 = arith.mulf %130, %134 : vector<2x8x8xf32>
    %136 = arith.truncf %135 : vector<2x8x8xf32> to vector<2x8x8xbf16>
    "tpu.trace_start"() <{level = 10 : i32, message = "bqk,bkd->bqd"}> : () -> ()
    %cst_47 = arith.constant dense<0.000000e+00> : vector<2x8x8xf32>
    %137 = tpu.matmul %136, %122, %cst_47 {dimension_numbers = #tpu.dot_dimension_numbers<[2], [1], [1], [2], [0, 0, 0, 1, 1, 2], [0], [0]>} : vector<2x8x8xbf16>, vector<2x8x8xbf16>, vector<2x8x8xf32> -> vector<2x8x8xf32>
    "tpu.trace_stop"() : () -> ()
    %138 = vector.shape_cast %137 : vector<2x8x8xf32> to vector<16x8xf32>
    %139 = arith.truncf %138 : vector<16x8xf32> to vector<16x8xbf16>
    %c0_48 = arith.constant 0 : index
    %c24 = arith.constant 24 : index
    %140 = vector.load %arg14[%c0_48, %c24] : memref<16x32xbf16, #tpu.memory_space<vmem>>, vector<16x8xbf16>
    tpu.vector_store %arg14[%c0_48, %c24], %139 {strides = array<i32>} : memref<16x32xbf16, #tpu.memory_space<vmem>>, vector<16x8xbf16>,
    %c0_49 = arith.constant 0 : index
    %c0_50 = arith.constant 0 : index
    %141 = vector.load %arg14[%c0_49, %c0_50] : memref<16x32xbf16, #tpu.memory_space<vmem>>, vector<16x32xbf16>
    %c0_51 = arith.constant 0 : index
    %c0_52 = arith.constant 0 : index
    %142 = vector.load %arg11[%c0_51, %c0_52] : memref<32x32xbf16, #tpu.memory_space<vmem>>, vector<32x32xbf16>
    %cst_53 = arith.constant dense<0.000000e+00> : vector<16x32xf32>
    %143 = tpu.matmul %141, %142, %cst_53 {dimension_numbers = #tpu.dot_dimension_numbers<[1], [0], [0], [1], [0, 0, 1, 1], [], []>} : vector<16x32xbf16>, vector<32x32xbf16>, vector<16x32xf32> -> vector<16x32xf32>
    %c0_54 = arith.constant 0 : index
    %c0_55 = arith.constant 0 : index
    %144 = vector.load %arg12[%c0_54, %c0_55] : memref<1x32xf32, #tpu.memory_space<vmem>>, vector<1x32xf32>
    %145 = vector.broadcast %144 : vector<1x32xf32> to vector<16x32xf32>
    %146 = arith.addf %143, %145 : vector<16x32xf32>
    %147 = arith.addf %0, %146 : vector<16x32xf32>
    %c0_56 = arith.constant 0 : index
    %c0_57 = arith.constant 0 : index
    %148 = vector.load %arg13[%c0_56, %c0_57] : memref<16x32xf32, #tpu.memory_space<vmem>>, vector<16x32xf32>
    tpu.vector_store %arg13[%c0_56, %c0_57], %147 {strides = array<i32>} : memref<16x32xf32, #tpu.memory_space<vmem>>, vector<16x32xf32>,
    return
  }
  func.func @transform_0(%arg0: i32) -> (i32, i32) {
    %c0_i32 = arith.constant 0 : i32
    %c0_i32_0 = arith.constant 0 : i32
    return %arg0, %c0_i32 : i32, i32
  }
  func.func @transform_1(%arg0: i32) -> (i32, i32, i32) {
    %c0_i32 = arith.constant 0 : i32
    %c0_i32_0 = arith.constant 0 : i32
    %c0_i32_1 = arith.constant 0 : i32
    return %arg0, %c0_i32, %c0_i32_0 : i32, i32, i32
  }
  func.func @transform_2(%arg0: i32) -> (i32, i32) {
    %c0_i32 = arith.constant 0 : i32
    %c0_i32_0 = arith.constant 0 : i32
    %c0_i32_1 = arith.constant 0 : i32
    return %c0_i32, %c0_i32_0 : i32, i32
  }
  func.func @transform_3(%arg0: i32) -> (i32, i32) {
    %c0_i32 = arith.constant 0 : i32
    %c0_i32_0 = arith.constant 0 : i32
    %c0_i32_1 = arith.constant 0 : i32
    return %c0_i32, %c0_i32_0 : i32, i32
  }
  func.func @transform_4(%arg0: i32) -> (i32, i32) {
    %c0_i32 = arith.constant 0 : i32
    %c0_i32_0 = arith.constant 0 : i32
    %c0_i32_1 = arith.constant 0 : i32
    return %c0_i32, %c0_i32_0 : i32, i32
  }
  func.func @transform_5(%arg0: i32) -> (i32, i32) {
    %c0_i32 = arith.constant 0 : i32
    %c0_i32_0 = arith.constant 0 : i32
    %c0_i32_1 = arith.constant 0 : i32
    return %c0_i32, %c0_i32_0 : i32, i32
  }
  func.func @transform_6(%arg0: i32) -> (i32, i32) {
    %c0_i32 = arith.constant 0 : i32
    %c0_i32_0 = arith.constant 0 : i32
    %c0_i32_1 = arith.constant 0 : i32
    return %c0_i32, %c0_i32_0 : i32, i32
  }
  func.func @transform_7(%arg0: i32) -> (i32, i32) {
    %c0_i32 = arith.constant 0 : i32
    %c0_i32_0 = arith.constant 0 : i32
    %c0_i32_1 = arith.constant 0 : i32
    return %c0_i32, %c0_i32_0 : i32, i32
  }
  func.func @transform_8(%arg0: i32) -> (i32, i32) {
    %c0_i32 = arith.constant 0 : i32
    %c0_i32_0 = arith.constant 0 : i32
    %c0_i32_1 = arith.constant 0 : i32
    return %c0_i32, %c0_i32_0 : i32, i32
  }
  func.func @transform_9(%arg0: i32) -> (i32, i32) {
    %c0_i32 = arith.constant 0 : i32
    %c0_i32_0 = arith.constant 0 : i32
    %c0_i32_1 = arith.constant 0 : i32
    return %c0_i32, %c0_i32_0 : i32, i32
  }
  func.func @transform_10(%arg0: i32) -> (i32, i32) {
    %c0_i32 = arith.constant 0 : i32
    %c0_i32_0 = arith.constant 0 : i32
    %c0_i32_1 = arith.constant 0 : i32
    return %c0_i32, %c0_i32_0 : i32, i32
  }
  func.func @transform_11(%arg0: i32) -> (i32, i32) {
    %c0_i32 = arith.constant 0 : i32
    %c0_i32_0 = arith.constant 0 : i32
    %c0_i32_1 = arith.constant 0 : i32
    return %c0_i32, %c0_i32_0 : i32, i32
  }
  func.func @transform_12(%arg0: i32) -> (i32, i32) {
    %c0_i32 = arith.constant 0 : i32
    %c0_i32_0 = arith.constant 0 : i32
    return %arg0, %c0_i32 : i32, i32
  }
}

module attributes {stable_mosaic.version = 11 : i64} {
  func.func @_ffn_block_kernel(%arg0: i32, %arg1: i32, %arg2: memref<16x32xf32, #tpu.memory_space<vmem>>, %arg3: memref<1x32xf32, #tpu.memory_space<vmem>>, %arg4: memref<1x32xf32, #tpu.memory_space<vmem>>, %arg5: memref<32x64xbf16, #tpu.memory_space<vmem>>, %arg6: memref<1x64xf32, #tpu.memory_space<vmem>>, %arg7: memref<64x32xbf16, #tpu.memory_space<vmem>>, %arg8: memref<1x32xf32, #tpu.memory_space<vmem>>, %arg9: memref<16x32xf32, #tpu.memory_space<vmem>>, %arg10: memref<16x32xbf16, #tpu.memory_space<vmem>>, %arg11: memref<16x32xf32, #tpu.memory_space<vmem>>) attributes {dimension_semantics = [#tpu.dimension_semantics<parallel>, #tpu.dimension_semantics<arbitrary>], iteration_bounds = array<i64: 1, 1>, scalar_prefetch = 0 : i64, scratch_operands = 2 : i64, tpu.core_type = #tpu.core_type<tc>, window_params = [{transform_indices = @transform_0, window_bounds = array<i64: 16, 32>}, {pipeline_mode = #tpu.pipeline_mode<synchronous>, transform_indices = @transform_1, window_bounds = array<i64: 1, 32>}, {pipeline_mode = #tpu.pipeline_mode<synchronous>, transform_indices = @transform_2, window_bounds = array<i64: 1, 32>}, {transform_indices = @transform_3, window_bounds = array<i64: 32, 64>}, {transform_indices = @transform_4, window_bounds = array<i64: 1, 64>}, {transform_indices = @transform_5, window_bounds = array<i64: 64, 32>}, {pipeline_mode = #tpu.pipeline_mode<synchronous>, transform_indices = @transform_6, window_bounds = array<i64: 1, 32>}, {transform_indices = @transform_7, window_bounds = array<i64: 16, 32>}]} {
    %c0_i32 = arith.constant 0 : i32
    %0 = arith.cmpi eq, %arg1, %c0_i32 : i32
    %1 = arith.extui %0 : i1 to i32
    %c0_i32_0 = arith.constant 0 : i32
    %2 = arith.cmpi ne, %1, %c0_i32_0 : i32
    scf.if %2 {
      %c0_29 = arith.constant 0 : index
      %c0_30 = arith.constant 0 : index
      %57 = vector.load %arg2[%c0_29, %c0_30] : memref<16x32xf32, #tpu.memory_space<vmem>>, vector<16x32xf32>
      %c0_31 = arith.constant 0 : index
      %c0_32 = arith.constant 0 : index
      %58 = vector.load %arg3[%c0_31, %c0_32] : memref<1x32xf32, #tpu.memory_space<vmem>>, vector<1x32xf32>
      %c0_33 = arith.constant 0 : index
      %c0_34 = arith.constant 0 : index
      %59 = vector.load %arg4[%c0_33, %c0_34] : memref<1x32xf32, #tpu.memory_space<vmem>>, vector<1x32xf32>
      %cst_35 = arith.constant dense<0.000000e+00> : vector<16xf32>
      %60 = vector.multi_reduction <add>, %57, %cst_35 [1] : vector<16x32xf32> to vector<16xf32>
      %61 = vector.shape_cast %60 : vector<16xf32> to vector<16x1xf32>
      %cst_36 = arith.constant 3.200000e+01 : f32
      %62 = vector.broadcast %cst_36 : f32 to vector<16x1xf32>
      %63 = arith.divf %61, %62 : vector<16x1xf32>
      %64 = vector.broadcast %63 : vector<16x1xf32> to vector<16x32xf32>
      %65 = arith.subf %57, %64 : vector<16x32xf32>
      %66 = arith.mulf %65, %65 : vector<16x32xf32>
      %cst_37 = arith.constant dense<0.000000e+00> : vector<16xf32>
      %67 = vector.multi_reduction <add>, %66, %cst_37 [1] : vector<16x32xf32> to vector<16xf32>
      %68 = vector.shape_cast %67 : vector<16xf32> to vector<16x1xf32>
      %cst_38 = arith.constant 3.200000e+01 : f32
      %69 = vector.broadcast %cst_38 : f32 to vector<16x1xf32>
      %70 = arith.divf %68, %69 : vector<16x1xf32>
      %cst_39 = arith.constant 9.99999974E-6 : f32
      %71 = vector.broadcast %cst_39 : f32 to vector<16x1xf32>
      %72 = arith.addf %70, %71 : vector<16x1xf32>
      %73 = math.rsqrt %72 : vector<16x1xf32>
      %74 = vector.broadcast %73 : vector<16x1xf32> to vector<16x32xf32>
      %75 = arith.mulf %65, %74 : vector<16x32xf32>
      %76 = vector.broadcast %58 : vector<1x32xf32> to vector<16x32xf32>
      %77 = arith.mulf %75, %76 : vector<16x32xf32>
      %78 = vector.broadcast %59 : vector<1x32xf32> to vector<16x32xf32>
      %79 = arith.addf %77, %78 : vector<16x32xf32>
      %80 = arith.truncf %79 : vector<16x32xf32> to vector<16x32xbf16>
      %c0_40 = arith.constant 0 : index
      %c0_41 = arith.constant 0 : index
      %81 = vector.load %arg10[%c0_40, %c0_41] : memref<16x32xbf16, #tpu.memory_space<vmem>>, vector<16x32xbf16>
      tpu.vector_store %arg10[%c0_40, %c0_41], %80 {strides = array<i32>} : memref<16x32xbf16, #tpu.memory_space<vmem>>, vector<16x32xbf16>,
      %cst_42 = arith.constant 0.000000e+00 : f32
      %82 = vector.broadcast %cst_42 : f32 to vector<16x32xf32>
      %c0_43 = arith.constant 0 : index
      %c0_44 = arith.constant 0 : index
      %83 = vector.load %arg11[%c0_43, %c0_44] : memref<16x32xf32, #tpu.memory_space<vmem>>, vector<16x32xf32>
      tpu.vector_store %arg11[%c0_43, %c0_44], %82 {strides = array<i32>} : memref<16x32xf32, #tpu.memory_space<vmem>>, vector<16x32xf32>,
    } else {
    }
    %c0 = arith.constant 0 : index
    %c0_1 = arith.constant 0 : index
    %3 = vector.load %arg10[%c0, %c0_1] : memref<16x32xbf16, #tpu.memory_space<vmem>>, vector<16x32xbf16>
    %c0_2 = arith.constant 0 : index
    %c0_3 = arith.constant 0 : index
    %4 = vector.load %arg5[%c0_2, %c0_3] : memref<32x64xbf16, #tpu.memory_space<vmem>>, vector<32x64xbf16>
    %cst = arith.constant dense<0.000000e+00> : vector<16x64xf32>
    %5 = tpu.matmul %3, %4, %cst {dimension_numbers = #tpu.dot_dimension_numbers<[1], [0], [0], [1], [0, 0, 1, 1], [], []>} : vector<16x32xbf16>, vector<32x64xbf16>, vector<16x64xf32> -> vector<16x64xf32>
    %c0_4 = arith.constant 0 : index
    %c0_5 = arith.constant 0 : index
    %6 = vector.load %arg6[%c0_4, %c0_5] : memref<1x64xf32, #tpu.memory_space<vmem>>, vector<1x64xf32>
    %7 = vector.broadcast %6 : vector<1x64xf32> to vector<16x64xf32>
    %8 = arith.addf %5, %7 : vector<16x64xf32>
    %cst_6 = arith.constant 5.000000e-01 : f32
    %9 = vector.broadcast %cst_6 : f32 to vector<16x64xf32>
    %10 = arith.mulf %9, %8 : vector<16x64xf32>
    %cst_7 = arith.constant 0.707106769 : f32
    %11 = vector.broadcast %cst_7 : f32 to vector<16x64xf32>
    %12 = arith.mulf %8, %11 : vector<16x64xf32>
    %13 = math.absf %12 : vector<16x64xf32>
    %cst_8 = arith.constant 0.327591091 : f32
    %14 = vector.broadcast %cst_8 : f32 to vector<16x64xf32>
    %15 = arith.mulf %14, %13 : vector<16x64xf32>
    %cst_9 = arith.constant 1.000000e+00 : f32
    %16 = vector.broadcast %cst_9 : f32 to vector<16x64xf32>
    %17 = arith.addf %16, %15 : vector<16x64xf32>
    %18 = tpu.reciprocal %17 {approx = true} : vector<16x64xf32> -> vector<16x64xf32>
    %cst_10 = arith.constant 1.06140542 : f32
    %19 = vector.broadcast %cst_10 : f32 to vector<16x64xf32>
    %20 = arith.mulf %19, %18 : vector<16x64xf32>
    %cst_11 = arith.constant -1.45315206 : f32
    %21 = vector.broadcast %cst_11 : f32 to vector<16x64xf32>
    %22 = arith.addf %20, %21 : vector<16x64xf32>
    %23 = arith.mulf %22, %18 : vector<16x64xf32>
    %cst_12 = arith.constant 1.42141378 : f32
    %24 = vector.broadcast %cst_12 : f32 to vector<16x64xf32>
    %25 = arith.addf %23, %24 : vector<16x64xf32>
    %26 = arith.mulf %25, %18 : vector<16x64xf32>
    %cst_13 = arith.constant -0.284496725 : f32
    %27 = vector.broadcast %cst_13 : f32 to vector<16x64xf32>
    %28 = arith.addf %26, %27 : vector<16x64xf32>
    %29 = arith.mulf %28, %18 : vector<16x64xf32>
    %cst_14 = arith.constant 0.254829586 : f32
    %30 = vector.broadcast %cst_14 : f32 to vector<16x64xf32>
    %31 = arith.addf %29, %30 : vector<16x64xf32>
    %32 = arith.mulf %31, %18 : vector<16x64xf32>
    %cst_15 = arith.constant 0.000000e+00 : f32
    %33 = vector.broadcast %cst_15 : f32 to vector<16x64xf32>
    %34 = arith.subf %33, %13 : vector<16x64xf32>
    %35 = arith.mulf %34, %13 : vector<16x64xf32>
    %36 = math.exp %35 : vector<16x64xf32>
    %37 = arith.mulf %32, %36 : vector<16x64xf32>
    %cst_16 = arith.constant 1.000000e+00 : f32
    %38 = vector.broadcast %cst_16 : f32 to vector<16x64xf32>
    %39 = arith.subf %38, %37 : vector<16x64xf32>
    %cst_17 = arith.constant 0.000000e+00 : f32
    %40 = vector.broadcast %cst_17 : f32 to vector<16x64xf32>
    %41 = arith.cmpf olt, %12, %40 : vector<16x64xf32>
    %cst_18 = arith.constant 0.000000e+00 : f32
    %42 = vector.broadcast %cst_18 : f32 to vector<16x64xf32>
    %43 = arith.subf %42, %39 : vector<16x64xf32>
    %44 = arith.select %41, %43, %39 : vector<16x64xi1>, vector<16x64xf32>
    %cst_19 = arith.constant 1.000000e+00 : f32
    %45 = vector.broadcast %cst_19 : f32 to vector<16x64xf32>
    %46 = arith.addf %45, %44 : vector<16x64xf32>
    %47 = arith.mulf %10, %46 : vector<16x64xf32>
    %48 = arith.truncf %47 : vector<16x64xf32> to vector<16x64xbf16>
    %c0_20 = arith.constant 0 : index
    %c0_21 = arith.constant 0 : index
    %49 = vector.load %arg11[%c0_20, %c0_21] : memref<16x32xf32, #tpu.memory_space<vmem>>, vector<16x32xf32>
    %c0_22 = arith.constant 0 : index
    %c0_23 = arith.constant 0 : index
    %50 = vector.load %arg7[%c0_22, %c0_23] : memref<64x32xbf16, #tpu.memory_space<vmem>>, vector<64x32xbf16>
    %cst_24 = arith.constant dense<0.000000e+00> : vector<16x32xf32>
    %51 = tpu.matmul %48, %50, %cst_24 {dimension_numbers = #tpu.dot_dimension_numbers<[1], [0], [0], [1], [0, 0, 1, 1], [], []>} : vector<16x64xbf16>, vector<64x32xbf16>, vector<16x32xf32> -> vector<16x32xf32>
    %52 = arith.addf %49, %51 : vector<16x32xf32>
    %c0_25 = arith.constant 0 : index
    %c0_26 = arith.constant 0 : index
    %53 = vector.load %arg11[%c0_25, %c0_26] : memref<16x32xf32, #tpu.memory_space<vmem>>, vector<16x32xf32>
    tpu.vector_store %arg11[%c0_25, %c0_26], %52 {strides = array<i32>} : memref<16x32xf32, #tpu.memory_space<vmem>>, vector<16x32xf32>,
    %c0_i32_27 = arith.constant 0 : i32
    %54 = arith.cmpi eq, %arg1, %c0_i32_27 : i32
    %55 = arith.extui %54 : i1 to i32
    %c0_i32_28 = arith.constant 0 : i32
    %56 = arith.cmpi ne, %55, %c0_i32_28 : i32
    scf.if %56 {
      %c0_29 = arith.constant 0 : index
      %c0_30 = arith.constant 0 : index
      %57 = vector.load %arg2[%c0_29, %c0_30] : memref<16x32xf32, #tpu.memory_space<vmem>>, vector<16x32xf32>
      %c0_31 = arith.constant 0 : index
      %c0_32 = arith.constant 0 : index
      %58 = vector.load %arg11[%c0_31, %c0_32] : memref<16x32xf32, #tpu.memory_space<vmem>>, vector<16x32xf32>
      %59 = arith.addf %57, %58 : vector<16x32xf32>
      %c0_33 = arith.constant 0 : index
      %c0_34 = arith.constant 0 : index
      %60 = vector.load %arg8[%c0_33, %c0_34] : memref<1x32xf32, #tpu.memory_space<vmem>>, vector<1x32xf32>
      %61 = vector.broadcast %60 : vector<1x32xf32> to vector<16x32xf32>
      %62 = arith.addf %59, %61 : vector<16x32xf32>
      %c0_35 = arith.constant 0 : index
      %c0_36 = arith.constant 0 : index
      %63 = vector.load %arg9[%c0_35, %c0_36] : memref<16x32xf32, #tpu.memory_space<vmem>>, vector<16x32xf32>
      tpu.vector_store %arg9[%c0_35, %c0_36], %62 {strides = array<i32>} : memref<16x32xf32, #tpu.memory_space<vmem>>, vector<16x32xf32>,
    } else {
    }
    return
  }
  func.func @transform_0(%arg0: i32, %arg1: i32) -> (i32, i32) {
    %c0_i32 = arith.constant 0 : i32
    %c0_i32_0 = arith.constant 0 : i32
    return %arg0, %c0_i32 : i32, i32
  }
  func.func @transform_1(%arg0: i32, %arg1: i32) -> (i32, i32) {
    %c0_i32 = arith.constant 0 : i32
    %c0_i32_0 = arith.constant 0 : i32
    %c0_i32_1 = arith.constant 0 : i32
    return %c0_i32, %c0_i32_0 : i32, i32
  }
  func.func @transform_2(%arg0: i32, %arg1: i32) -> (i32, i32) {
    %c0_i32 = arith.constant 0 : i32
    %c0_i32_0 = arith.constant 0 : i32
    %c0_i32_1 = arith.constant 0 : i32
    return %c0_i32, %c0_i32_0 : i32, i32
  }
  func.func @transform_3(%arg0: i32, %arg1: i32) -> (i32, i32) {
    %c0_i32 = arith.constant 0 : i32
    %c0_i32_0 = arith.constant 0 : i32
    return %c0_i32, %arg1 : i32, i32
  }
  func.func @transform_4(%arg0: i32, %arg1: i32) -> (i32, i32) {
    %c0_i32 = arith.constant 0 : i32
    %c0_i32_0 = arith.constant 0 : i32
    return %c0_i32, %arg1 : i32, i32
  }
  func.func @transform_5(%arg0: i32, %arg1: i32) -> (i32, i32) {
    %c0_i32 = arith.constant 0 : i32
    %c0_i32_0 = arith.constant 0 : i32
    return %arg1, %c0_i32 : i32, i32
  }
  func.func @transform_6(%arg0: i32, %arg1: i32) -> (i32, i32) {
    %c0_i32 = arith.constant 0 : i32
    %c0_i32_0 = arith.constant 0 : i32
    %c0_i32_1 = arith.constant 0 : i32
    return %c0_i32, %c0_i32_0 : i32, i32
  }
  func.func @transform_7(%arg0: i32, %arg1: i32) -> (i32, i32) {
    %c0_i32 = arith.constant 0 : i32
    %c0_i32_0 = arith.constant 0 : i32
    return %arg0, %c0_i32 : i32, i32
  }
}

module attributes {stable_mosaic.version = 11 : i64} {
  func.func @_ffn_block_kernel(%arg0: i32, %arg1: i32, %arg2: memref<16x32xf32, #tpu.memory_space<vmem>>, %arg3: memref<1x32xf32, #tpu.memory_space<vmem>>, %arg4: memref<1x32xf32, #tpu.memory_space<vmem>>, %arg5: memref<32x64xbf16, #tpu.memory_space<vmem>>, %arg6: memref<1x64xf32, #tpu.memory_space<vmem>>, %arg7: memref<64x32xbf16, #tpu.memory_space<vmem>>, %arg8: memref<1x32xf32, #tpu.memory_space<vmem>>, %arg9: memref<16x32xf32, #tpu.memory_space<vmem>>, %arg10: memref<16x32xbf16, #tpu.memory_space<vmem>>, %arg11: memref<16x32xf32, #tpu.memory_space<vmem>>) attributes {dimension_semantics = [#tpu.dimension_semantics<parallel>, #tpu.dimension_semantics<arbitrary>], iteration_bounds = array<i64: 1, 1>, scalar_prefetch = 0 : i64, scratch_operands = 2 : i64, tpu.core_type = #tpu.core_type<tc>, window_params = [{transform_indices = @transform_0, window_bounds = array<i64: 16, 32>}, {pipeline_mode = #tpu.pipeline_mode<synchronous>, transform_indices = @transform_1, window_bounds = array<i64: 1, 32>}, {pipeline_mode = #tpu.pipeline_mode<synchronous>, transform_indices = @transform_2, window_bounds = array<i64: 1, 32>}, {transform_indices = @transform_3, window_bounds = array<i64: 32, 64>}, {transform_indices = @transform_4, window_bounds = array<i64: 1, 64>}, {transform_indices = @transform_5, window_bounds = array<i64: 64, 32>}, {pipeline_mode = #tpu.pipeline_mode<synchronous>, transform_indices = @transform_6, window_bounds = array<i64: 1, 32>}, {transform_indices = @transform_7, window_bounds = array<i64: 16, 32>}]} {
    %c0_i32 = arith.constant 0 : i32
    %0 = arith.cmpi eq, %arg1, %c0_i32 : i32
    %1 = arith.extui %0 : i1 to i32
    %c0_i32_0 = arith.constant 0 : i32
    %2 = arith.cmpi ne, %1, %c0_i32_0 : i32
    scf.if %2 {
      %c0_29 = arith.constant 0 : index
      %c0_30 = arith.constant 0 : index
      %57 = vector.load %arg2[%c0_29, %c0_30] : memref<16x32xf32, #tpu.memory_space<vmem>>, vector<16x32xf32>
      %c0_31 = arith.constant 0 : index
      %c0_32 = arith.constant 0 : index
      %58 = vector.load %arg3[%c0_31, %c0_32] : memref<1x32xf32, #tpu.memory_space<vmem>>, vector<1x32xf32>
      %c0_33 = arith.constant 0 : index
      %c0_34 = arith.constant 0 : index
      %59 = vector.load %arg4[%c0_33, %c0_34] : memref<1x32xf32, #tpu.memory_space<vmem>>, vector<1x32xf32>
      %cst_35 = arith.constant dense<0.000000e+00> : vector<16xf32>
      %60 = vector.multi_reduction <add>, %57, %cst_35 [1] : vector<16x32xf32> to vector<16xf32>
      %61 = vector.shape_cast %60 : vector<16xf32> to vector<16x1xf32>
      %cst_36 = arith.constant 3.200000e+01 : f32
      %62 = vector.broadcast %cst_36 : f32 to vector<16x1xf32>
      %63 = arith.divf %61, %62 : vector<16x1xf32>
      %64 = vector.broadcast %63 : vector<16x1xf32> to vector<16x32xf32>
      %65 = arith.subf %57, %64 : vector<16x32xf32>
      %66 = arith.mulf %65, %65 : vector<16x32xf32>
      %cst_37 = arith.constant dense<0.000000e+00> : vector<16xf32>
      %67 = vector.multi_reduction <add>, %66, %cst_37 [1] : vector<16x32xf32> to vector<16xf32>
      %68 = vector.shape_cast %67 : vector<16xf32> to vector<16x1xf32>
      %cst_38 = arith.constant 3.200000e+01 : f32
      %69 = vector.broadcast %cst_38 : f32 to vector<16x1xf32>
      %70 = arith.divf %68, %69 : vector<16x1xf32>
      %cst_39 = arith.constant 9.99999974E-6 : f32
      %71 = vector.broadcast %cst_39 : f32 to vector<16x1xf32>
      %72 = arith.addf %70, %71 : vector<16x1xf32>
      %73 = math.rsqrt %72 : vector<16x1xf32>
      %74 = vector.broadcast %73 : vector<16x1xf32> to vector<16x32xf32>
      %75 = arith.mulf %65, %74 : vector<16x32xf32>
      %76 = vector.broadcast %58 : vector<1x32xf32> to vector<16x32xf32>
      %77 = arith.mulf %75, %76 : vector<16x32xf32>
      %78 = vector.broadcast %59 : vector<1x32xf32> to vector<16x32xf32>
      %79 = arith.addf %77, %78 : vector<16x32xf32>
      %80 = arith.truncf %79 : vector<16x32xf32> to vector<16x32xbf16>
      %c0_40 = arith.constant 0 : index
      %c0_41 = arith.constant 0 : index
      %81 = vector.load %arg10[%c0_40, %c0_41] : memref<16x32xbf16, #tpu.memory_space<vmem>>, vector<16x32xbf16>
      tpu.vector_store %arg10[%c0_40, %c0_41], %80 {strides = array<i32>} : memref<16x32xbf16, #tpu.memory_space<vmem>>, vector<16x32xbf16>,
      %cst_42 = arith.constant 0.000000e+00 : f32
      %82 = vector.broadcast %cst_42 : f32 to vector<16x32xf32>
      %c0_43 = arith.constant 0 : index
      %c0_44 = arith.constant 0 : index
      %83 = vector.load %arg11[%c0_43, %c0_44] : memref<16x32xf32, #tpu.memory_space<vmem>>, vector<16x32xf32>
      tpu.vector_store %arg11[%c0_43, %c0_44], %82 {strides = array<i32>} : memref<16x32xf32, #tpu.memory_space<vmem>>, vector<16x32xf32>,
    } else {
    }
    %c0 = arith.constant 0 : index
    %c0_1 = arith.constant 0 : index
    %3 = vector.load %arg10[%c0, %c0_1] : memref<16x32xbf16, #tpu.memory_space<vmem>>, vector<16x32xbf16>
    %c0_2 = arith.constant 0 : index
    %c0_3 = arith.constant 0 : index
    %4 = vector.load %arg5[%c0_2, %c0_3] : memref<32x64xbf16, #tpu.memory_space<vmem>>, vector<32x64xbf16>
    %cst = arith.constant dense<0.000000e+00> : vector<16x64xf32>
    %5 = tpu.matmul %3, %4, %cst {dimension_numbers = #tpu.dot_dimension_numbers<[1], [0], [0], [1], [0, 0, 1, 1], [], []>} : vector<16x32xbf16>, vector<32x64xbf16>, vector<16x64xf32> -> vector<16x64xf32>
    %c0_4 = arith.constant 0 : index
    %c0_5 = arith.constant 0 : index
    %6 = vector.load %arg6[%c0_4, %c0_5] : memref<1x64xf32, #tpu.memory_space<vmem>>, vector<1x64xf32>
    %7 = vector.broadcast %6 : vector<1x64xf32> to vector<16x64xf32>
    %8 = arith.addf %5, %7 : vector<16x64xf32>
    %cst_6 = arith.constant 5.000000e-01 : f32
    %9 = vector.broadcast %cst_6 : f32 to vector<16x64xf32>
    %10 = arith.mulf %9, %8 : vector<16x64xf32>
    %cst_7 = arith.constant 0.707106769 : f32
    %11 = vector.broadcast %cst_7 : f32 to vector<16x64xf32>
    %12 = arith.mulf %8, %11 : vector<16x64xf32>
    %13 = math.absf %12 : vector<16x64xf32>
    %cst_8 = arith.constant 0.327591091 : f32
    %14 = vector.broadcast %cst_8 : f32 to vector<16x64xf32>
    %15 = arith.mulf %14, %13 : vector<16x64xf32>
    %cst_9 = arith.constant 1.000000e+00 : f32
    %16 = vector.broadcast %cst_9 : f32 to vector<16x64xf32>
    %17 = arith.addf %16, %15 : vector<16x64xf32>
    %18 = tpu.reciprocal %17 {approx = true} : vector<16x64xf32> -> vector<16x64xf32>
    %cst_10 = arith.constant 1.06140542 : f32
    %19 = vector.broadcast %cst_10 : f32 to vector<16x64xf32>
    %20 = arith.mulf %19, %18 : vector<16x64xf32>
    %cst_11 = arith.constant -1.45315206 : f32
    %21 = vector.broadcast %cst_11 : f32 to vector<16x64xf32>
    %22 = arith.addf %20, %21 : vector<16x64xf32>
    %23 = arith.mulf %22, %18 : vector<16x64xf32>
    %cst_12 = arith.constant 1.42141378 : f32
    %24 = vector.broadcast %cst_12 : f32 to vector<16x64xf32>
    %25 = arith.addf %23, %24 : vector<16x64xf32>
    %26 = arith.mulf %25, %18 : vector<16x64xf32>
    %cst_13 = arith.constant -0.284496725 : f32
    %27 = vector.broadcast %cst_13 : f32 to vector<16x64xf32>
    %28 = arith.addf %26, %27 : vector<16x64xf32>
    %29 = arith.mulf %28, %18 : vector<16x64xf32>
    %cst_14 = arith.constant 0.254829586 : f32
    %30 = vector.broadcast %cst_14 : f32 to vector<16x64xf32>
    %31 = arith.addf %29, %30 : vector<16x64xf32>
    %32 = arith.mulf %31, %18 : vector<16x64xf32>
    %cst_15 = arith.constant 0.000000e+00 : f32
    %33 = vector.broadcast %cst_15 : f32 to vector<16x64xf32>
    %34 = arith.subf %33, %13 : vector<16x64xf32>
    %35 = arith.mulf %34, %13 : vector<16x64xf32>
    %36 = math.exp %35 : vector<16x64xf32>
    %37 = arith.mulf %32, %36 : vector<16x64xf32>
    %cst_16 = arith.constant 1.000000e+00 : f32
    %38 = vector.broadcast %cst_16 : f32 to vector<16x64xf32>
    %39 = arith.subf %38, %37 : vector<16x64xf32>
    %cst_17 = arith.constant 0.000000e+00 : f32
    %40 = vector.broadcast %cst_17 : f32 to vector<16x64xf32>
    %41 = arith.cmpf olt, %12, %40 : vector<16x64xf32>
    %cst_18 = arith.constant 0.000000e+00 : f32
    %42 = vector.broadcast %cst_18 : f32 to vector<16x64xf32>
    %43 = arith.subf %42, %39 : vector<16x64xf32>
    %44 = arith.select %41, %43, %39 : vector<16x64xi1>, vector<16x64xf32>
    %cst_19 = arith.constant 1.000000e+00 : f32
    %45 = vector.broadcast %cst_19 : f32 to vector<16x64xf32>
    %46 = arith.addf %45, %44 : vector<16x64xf32>
    %47 = arith.mulf %10, %46 : vector<16x64xf32>
    %48 = arith.truncf %47 : vector<16x64xf32> to vector<16x64xbf16>
    %c0_20 = arith.constant 0 : index
    %c0_21 = arith.constant 0 : index
    %49 = vector.load %arg11[%c0_20, %c0_21] : memref<16x32xf32, #tpu.memory_space<vmem>>, vector<16x32xf32>
    %c0_22 = arith.constant 0 : index
    %c0_23 = arith.constant 0 : index
    %50 = vector.load %arg7[%c0_22, %c0_23] : memref<64x32xbf16, #tpu.memory_space<vmem>>, vector<64x32xbf16>
    %cst_24 = arith.constant dense<0.000000e+00> : vector<16x32xf32>
    %51 = tpu.matmul %48, %50, %cst_24 {dimension_numbers = #tpu.dot_dimension_numbers<[1], [0], [0], [1], [0, 0, 1, 1], [], []>} : vector<16x64xbf16>, vector<64x32xbf16>, vector<16x32xf32> -> vector<16x32xf32>
    %52 = arith.addf %49, %51 : vector<16x32xf32>
    %c0_25 = arith.constant 0 : index
    %c0_26 = arith.constant 0 : index
    %53 = vector.load %arg11[%c0_25, %c0_26] : memref<16x32xf32, #tpu.memory_space<vmem>>, vector<16x32xf32>
    tpu.vector_store %arg11[%c0_25, %c0_26], %52 {strides = array<i32>} : memref<16x32xf32, #tpu.memory_space<vmem>>, vector<16x32xf32>,
    %c0_i32_27 = arith.constant 0 : i32
    %54 = arith.cmpi eq, %arg1, %c0_i32_27 : i32
    %55 = arith.extui %54 : i1 to i32
    %c0_i32_28 = arith.constant 0 : i32
    %56 = arith.cmpi ne, %55, %c0_i32_28 : i32
    scf.if %56 {
      %c0_29 = arith.constant 0 : index
      %c0_30 = arith.constant 0 : index
      %57 = vector.load %arg2[%c0_29, %c0_30] : memref<16x32xf32, #tpu.memory_space<vmem>>, vector<16x32xf32>
      %c0_31 = arith.constant 0 : index
      %c0_32 = arith.constant 0 : index
      %58 = vector.load %arg11[%c0_31, %c0_32] : memref<16x32xf32, #tpu.memory_space<vmem>>, vector<16x32xf32>
      %59 = arith.addf %57, %58 : vector<16x32xf32>
      %c0_33 = arith.constant 0 : index
      %c0_34 = arith.constant 0 : index
      %60 = vector.load %arg8[%c0_33, %c0_34] : memref<1x32xf32, #tpu.memory_space<vmem>>, vector<1x32xf32>
      %61 = vector.broadcast %60 : vector<1x32xf32> to vector<16x32xf32>
      %62 = arith.addf %59, %61 : vector<16x32xf32>
      %c0_35 = arith.constant 0 : index
      %c0_36 = arith.constant 0 : index
      %63 = vector.load %arg9[%c0_35, %c0_36] : memref<16x32xf32, #tpu.memory_space<vmem>>, vector<16x32xf32>
      tpu.vector_store %arg9[%c0_35, %c0_36], %62 {strides = array<i32>} : memref<16x32xf32, #tpu.memory_space<vmem>>, vector<16x32xf32>,
    } else {
    }
    return
  }
  func.func @transform_0(%arg0: i32, %arg1: i32) -> (i32, i32) {
    %c0_i32 = arith.constant 0 : i32
    %c0_i32_0 = arith.constant 0 : i32
    return %arg0, %c0_i32 : i32, i32
  }
  func.func @transform_1(%arg0: i32, %arg1: i32) -> (i32, i32) {
    %c0_i32 = arith.constant 0 : i32
    %c0_i32_0 = arith.constant 0 : i32
    %c0_i32_1 = arith.constant 0 : i32
    return %c0_i32, %c0_i32_0 : i32, i32
  }
  func.func @transform_2(%arg0: i32, %arg1: i32) -> (i32, i32) {
    %c0_i32 = arith.constant 0 : i32
    %c0_i32_0 = arith.constant 0 : i32
    %c0_i32_1 = arith.constant 0 : i32
    return %c0_i32, %c0_i32_0 : i32, i32
  }
  func.func @transform_3(%arg0: i32, %arg1: i32) -> (i32, i32) {
    %c0_i32 = arith.constant 0 : i32
    %c0_i32_0 = arith.constant 0 : i32
    return %c0_i32, %arg1 : i32, i32
  }
  func.func @transform_4(%arg0: i32, %arg1: i32) -> (i32, i32) {
    %c0_i32 = arith.constant 0 : i32
    %c0_i32_0 = arith.constant 0 : i32
    return %c0_i32, %arg1 : i32, i32
  }
  func.func @transform_5(%arg0: i32, %arg1: i32) -> (i32, i32) {
    %c0_i32 = arith.constant 0 : i32
    %c0_i32_0 = arith.constant 0 : i32
    return %arg1, %c0_i32 : i32, i32
  }
  func.func @transform_6(%arg0: i32, %arg1: i32) -> (i32, i32) {
    %c0_i32 = arith.constant 0 : i32
    %c0_i32_0 = arith.constant 0 : i32
    %c0_i32_1 = arith.constant 0 : i32
    return %c0_i32, %c0_i32_0 : i32, i32
  }
  func.func @transform_7(%arg0: i32, %arg1: i32) -> (i32, i32) {
    %c0_i32 = arith.constant 0 : i32
    %c0_i32_0 = arith.constant 0 : i32
    return %arg0, %c0_i32 : i32, i32
  }
}

</mosaic_0001>

<llo_original>
// kernel: bert_forward.7
$region0: #{bert_forward.7}
  #allocation0 [shape = 'u32[]', space=smem, size = 0x4, offset = 0x4, fixed_abs, tag = 'smem constant byte address 0x4 - core index']
  #allocation1 [shape = 'u32[144,128]{1,0:T(1,128)}', space=vmem, size = 0x12000, scoped, tag = 'internal scratch']
  #allocation2 [shape = 'bf16[16,32]{1,0:T(16,128)(2,1)}', space=vmem, size = 0x1000, scoped, tag = 'scratch operand']
  #allocation3 [shape = 'f32[16,32]{1,0:T(8,128)}', space=vmem, size = 0x2000, scoped, tag = 'scratch operand']
  %s0 = inlined_call_operand.vmem [shape: f32[16,32], index: 0, kind: input, shape index: {}]
  %s1 = inlined_call_operand.vmem [shape: f32[1,32], index: 1, kind: input, shape index: {}]
  %s2 = inlined_call_operand.vmem [shape: f32[1,32], index: 2, kind: input, shape index: {}]
  %s3 = inlined_call_operand.vmem [shape: bf16[32,64], index: 3, kind: input, shape index: {}]
  %s4 = inlined_call_operand.vmem [shape: f32[1,64], index: 4, kind: input, shape index: {}]
  %s5 = inlined_call_operand.vmem [shape: bf16[64,32], index: 5, kind: input, shape index: {}]
  %s6 = inlined_call_operand.vmem [shape: f32[1,32], index: 6, kind: input, shape index: {}]
  %s7 = inlined_call_operand.hbm [shape: f32[16,32], index: 7, kind: output, shape index: {}]
  %s8 = sld [smem:[#allocation0]]
  $region46: #{bert_forward.7} parent=0
    _
  %s10 = ssub.s32 1, %s8
  %s11 = scalar_select 0, %s10, %s8
  $region1: #{bert_forward.7} parent=0
    #allocation4 [shape = 'u8[8192]{0}', space=vmem, size = 0x2000, scoped, tag = 'output window, operand 0, single buffered']
    #allocation5 [shape = 's32[1]{0}', space=sflag, size = 0x4, scoped, tag = 'scoped memory for bert_forward.7']
    %12 = vsyncpa [#allocation5], 0
    // Predicated region
    $region2: #{bert_forward.7} parent=1 // pred_check
      _
    $region3: #{bert_forward.7} parent=1 // pred_check_branch
      %14 = sbr.rel (0) target = $region5
    $region4: #{bert_forward.7} parent=1 // pred_region
      _
    $region5: #{bert_forward.7} parent=1 // pred_fallthru
      _
    // Predicated region
    $region6: #{bert_forward.7} parent=1 // pred_check
      _
    $region7: #{bert_forward.7} parent=1 // pred_check_branch
      %16 = sbr.rel (0) target = $region9
    $region8: #{bert_forward.7} parent=1 // pred_region
      _
    $region9: #{bert_forward.7} parent=1 // pred_fallthru
      _
    // Predicated region
    $region10: #{bert_forward.7} parent=1 // pred_check
      _
    $region11: #{bert_forward.7} parent=1 // pred_check_branch
      %18 = sbr.rel (0) target = $region13
    $region12: #{bert_forward.7} parent=1 // pred_region
      _
    $region13: #{bert_forward.7} parent=1 // pred_fallthru
      _
    // Predicated region
    $region14: #{bert_forward.7} parent=1 // pred_check
      _
    $region15: #{bert_forward.7} parent=1 // pred_check_branch
      %20 = sbr.rel (0) target = $region17
    $region16: #{bert_forward.7} parent=1 // pred_region
      _
    $region17: #{bert_forward.7} parent=1 // pred_fallthru
      _
    // Predicated region
    $region18: #{bert_forward.7} parent=1 // pred_check
      _
    $region19: #{bert_forward.7} parent=1 // pred_check_branch
      %22 = sbr.rel (0) target = $region21
    $region20: #{bert_forward.7} parent=1 // pred_region
      _
    $region21: #{bert_forward.7} parent=1 // pred_fallthru
      _
    // Predicated region
    $region22: #{bert_forward.7} parent=1 // pred_check
      _
    $region23: #{bert_forward.7} parent=1 // pred_check_branch
      %24 = sbr.rel (0) target = $region25
    $region24: #{bert_forward.7} parent=1 // pred_region
      _
    $region25: #{bert_forward.7} parent=1 // pred_fallthru
      _
    // Predicated region
    $region26: #{bert_forward.7} parent=1 // pred_check
      _
    $region27: #{bert_forward.7} parent=1 // pred_check_branch
      %26 = sbr.rel (0) target = $region29
    $region28: #{bert_forward.7} parent=1 // pred_region
      _
    $region29: #{bert_forward.7} parent=1 // pred_fallthru
      _
    %p28 = scmp.eq.s32.totalorder 0, 0
    // Predicated region
    $region30: #{bert_forward.7} parent=1 // pred_check
      %p29 = pneg %p28
    $region31: #{bert_forward.7} parent=1 // pred_check_branch
      %31 = sbr.rel (%p29) target = $region33
    $region32: #{bert_forward.7} parent=1 // pred_region
      %v32 = vld [vmem:[%s0] sm:$0xff]
      %v33 = vld [vmem:[%s0 + $0x8] sm:$0xff]
      %v34 = vld [vmem:[%s1] sm:$0x1]
      %v35 = vld [vmem:[%s2] sm:$0x1]
      %vm36 = vcmask 261120
      %v37 = vsel %vm36, %v32, 0.0
      %38 = vadd.xlane.f32.xlu0 %v37
      %v39 = vpop.xlane.xlu0 %38
      %v40 = vsel %vm36, %v33, 0.0
      %41 = vadd.xlane.f32.xlu0 %v40
      %v42 = vpop.xlane.xlu0 %41
      %v43 = vrcp.pop 32.0
      %v44 = vmul.f32 %v39, %v43
      %v45 = vmul.f32 %v42, %v43
      %v46 = vsub.f32 %v32, %v44
      %v47 = vsub.f32 %v33, %v45
      %v48 = vmul.f32 %v46, %v46
      %v49 = vmul.f32 %v47, %v47
      %v50 = vsel %vm36, %v48, 0.0
      %51 = vadd.xlane.f32.xlu0 %v50
      %v52 = vpop.xlane.xlu0 %51
      %v53 = vsel %vm36, %v49, 0.0
      %54 = vadd.xlane.f32.xlu0 %v53
      %v55 = vpop.xlane.xlu0 %54
      %v56 = vmul.f32 %v52, %v43
      %v57 = vmul.f32 %v55, %v43
      %v58 = vadd.f32 %v56, 1e-05
      %v59 = vadd.f32 %v57, 1e-05
      %v60 = vrsqrt.pop %v58
      %v61 = vrsqrt.pop %v59
      %v62 = vmul.f32 %v46, %v60
      %v63 = vmul.f32 %v47, %v61
      %v65 = vlaneseq
      %v66 = vshrl.u32 %v65, 7
      %v67 = vsub.s32 0, %v66
      %v68 = vrot.slane %v34, %v67
      %v70 = vmul.f32 %v62, %v68
      %v71 = vmul.f32 %v63, %v68
      %v73 = vlaneseq
      %v74 = vshrl.u32 %v73, 7
      %v75 = vsub.s32 0, %v74
      %v76 = vrot.slane %v35, %v75
      %v78 = vadd.f32 %v70, %v76
      %v79 = vadd.f32 %v71, %v76
      %v80 = vpack.c.bf16 %v79, %v78
      %81 = vst.msk [vmem:[#allocation2] sm:$0xff] %vm36, %v80
      %82 = vst.msk [vmem:[#allocation3] sm:$0xff] %vm36, 0.0
      %83 = vst.msk [vmem:[#allocation3 + $0x8] sm:$0xff] %vm36, 0.0
    $region33: #{bert_forward.7} parent=1 // pred_fallthru
      _
    %v84 = vld [vmem:[#allocation2] sm:$0xff]
    %v85 = vld [vmem:[%s3] sm:$0xf]
    %v86 = vld [vmem:[%s3 + $0x4] sm:$0xf]
    %v87 = vld [vmem:[%s3 + $0x8] sm:$0xf]
    %v88 = vld [vmem:[%s3 + $0xc] sm:$0xf]
    %v89 = vld [vmem:[%s4] sm:$0x1]
    %v91 = vlaneseq
    %v92 = vshrl.u32 %v91, 7
    %v93 = vsub.s32 0, %v92
    %v94 = vrot.slane %v89, %v93
    %v100 = vunpack.c.l.b16 %v85
    %v101 = vunpack.c.l.b16 %v86
    %v102 = vunpack.c.l.b16 %v87
    %v103 = vunpack.c.l.b16 %v88
    %v104 = vpack.c.b16 %v101, %v100
    %v105 = vpack.c.b16 %v103, %v102
    %vm108 = vcmask 261120
    %v110 = vsel %vm108, %v84, 0
    %112 = vmatprep.subr.bf16.mxu0 0
    %113 = vmatpush1.bf16.msra.mxu0 %v104
    %114 = vmatprep.subr.bf16.mxu0 0
    %115 = vmatpush1.bf16.msra.mxu0 %v105
    %116 = vmatprep.subr.bf16.mxu0 0
    %117 = vmatpush1.bf16.msra.mxu0 0
    %118 = vmatprep.subr.bf16.mxu0 0
    %119 = vmatpush1.bf16.msra.mxu0 0
    %120 = vmatprep.subr.bf16.mxu0 0
    %121 = vmatpush1.bf16.msra.mxu0 0
    %122 = vmatprep.subr.bf16.mxu0 0
    %123 = vmatpush1.bf16.msra.mxu0 0
    %124 = vmatprep.subr.bf16.mxu0 0
    %125 = vmatpush1.bf16.msra.mxu0 0
    %126 = vmatprep.subr.bf16.mxu0 0
    %127 = vmatpush1.bf16.msra.mxu0 0
    %128 = vmatprep.subr.bf16.mxu0 0
    %129 = vmatpush1.bf16.msra.mxu0 0
    %130 = vmatprep.subr.bf16.mxu0 0
    %131 = vmatpush1.bf16.msra.mxu0 0
    %132 = vmatprep.subr.bf16.mxu0 0
    %133 = vmatpush1.bf16.msra.mxu0 0
    %134 = vmatprep.subr.bf16.mxu0 0
    %135 = vmatpush1.bf16.msra.mxu0 0
    %136 = vmatprep.subr.bf16.mxu0 0
    %137 = vmatpush1.bf16.msra.mxu0 0
    %138 = vmatprep.subr.bf16.mxu0 0
    %139 = vmatpush1.bf16.msra.mxu0 0
    %140 = vmatprep.subr.bf16.mxu0 0
    %141 = vmatpush1.bf16.msra.mxu0 0
    %142 = vmatprep.subr.bf16.mxu0 0
    %143 = vmatpush1.bf16.msra.mxu0 0
    %144 = vmatprep.mubr.bf16.mxu0 0
    %145 = vmatmul.mubr.bf16.gmra.mrb[0].mxu0 %v110
    %v146 = vpop.f32.mrb[0].mxu0
    %v147 = vadd.f32 %v94, %v146
    %v148 = vpop.f32.mrb[0].mxu0
    %v149 = vpop.f32.mrb[0].mxu0
    %v150 = vadd.f32 %v94, %v149
    %v151 = vpop.f32.mrb[0].mxu0
    %152 = vdwg.mxu0
    %v153 = vmul.f32 %v147, 0.5
    %v154 = vmul.f32 %v150, 0.5
    %v155 = vmul.f32 %v147, 0.70710677
    %v156 = vmul.f32 %v150, 0.70710677
    %v157 = vand.u32 2147483647, %v155
    %v158 = vand.u32 2147483647, %v156
    %v159 = vmul.f32 %v157, 0.3275911
    %v160 = vmul.f32 %v158, 0.3275911
    %v161 = vadd.f32 %v159, 1.0
    %v162 = vadd.f32 %v160, 1.0
    %v163 = vrcp.pop %v161
    %v164 = vrcp.pop %v162
    %v165 = vmul.f32 %v163, 1.0614054
    %v166 = vmul.f32 %v164, 1.0614054
    %v167 = vadd.f32 %v165, -1.4531521
    %v168 = vadd.f32 %v166, -1.4531521
    %v169 = vmul.f32 %v167, %v163
    %v170 = vmul.f32 %v168, %v164
    %v171 = vadd.f32 %v169, 1.4214138
    %v172 = vadd.f32 %v170, 1.4214138
    %v173 = vmul.f32 %v171, %v163
    %v174 = vmul.f32 %v172, %v164
    %v175 = vadd.f32 %v173, -0.28449672
    %v176 = vadd.f32 %v174, -0.28449672
    %v177 = vmul.f32 %v175, %v163
    %v178 = vmul.f32 %v176, %v164
    %v179 = vadd.f32 %v177, 0.2548296
    %v180 = vadd.f32 %v178, 0.2548296
    %v181 = vmul.f32 %v179, %v163
    %v182 = vmul.f32 %v180, %v164
    %v183 = vsub.f32 0.0, %v157
    %v184 = vsub.f32 0.0, %v158
    %v185 = vmul.f32 %v183, %v157
    %v186 = vmul.f32 %v184, %v158
    %v187 = vmul.f32 %v185, 1.442695
    %v188 = vpow.pop %v187
    %v189 = vmul.f32 %v186, 1.442695
    %v190 = vpow.pop %v189
    %v191 = vmul.f32 %v181, %v188
    %v192 = vmul.f32 %v182, %v190
    %v193 = vsub.f32 1.0, %v191
    %v194 = vsub.f32 1.0, %v192
    %vm195 = vcmp.lt.f32.partialorder %v155, 0.0
    %vm196 = vcmp.lt.f32.partialorder %v156, 0.0
    %v197 = vsub.f32 0.0, %v193
    %v198 = vsub.f32 0.0, %v194
    %v199 = vsel %vm195, %v197, %v193
    %v200 = vsel %vm196, %v198, %v194
    %v201 = vadd.f32 %v199, 1.0
    %v202 = vadd.f32 %v200, 1.0
    %v203 = vmul.f32 %v153, %v201
    %v204 = vmul.f32 %v154, %v202
    %v205 = vpack.c.bf16 %v204, %v203
    %v206 = vld [vmem:[#allocation3] sm:$0xff]
    %v207 = vld [vmem:[#allocation3 + $0x8] sm:$0xff]
    %v208 = vld [vmem:[%s5] sm:$0xf]
    %v209 = vld [vmem:[%s5 + $0x4] sm:$0xf]
    %v210 = vld [vmem:[%s5 + $0x8] sm:$0xf]
    %v211 = vld [vmem:[%s5 + $0xc] sm:$0xf]
    %v212 = vld [vmem:[%s5 + $0x10] sm:$0xf]
    %v213 = vld [vmem:[%s5 + $0x14] sm:$0xf]
    %v214 = vld [vmem:[%s5 + $0x18] sm:$0xf]
    %v215 = vld [vmem:[%s5 + $0x1c] sm:$0xf]
    %v224 = vunpack.c.l.b16 %v208
    %v225 = vunpack.c.l.b16 %v209
    %v226 = vunpack.c.l.b16 %v210
    %v227 = vunpack.c.l.b16 %v211
    %v228 = vunpack.c.l.b16 %v212
    %v229 = vunpack.c.l.b16 %v213
    %v230 = vunpack.c.l.b16 %v214
    %v231 = vunpack.c.l.b16 %v215
    %v232 = vpack.c.b16 %v225, %v224
    %v233 = vpack.c.b16 %v227, %v226
    %v234 = vpack.c.b16 %v229, %v228
    %v235 = vpack.c.b16 %v231, %v230
    %vm240 = vcmask 523264
    %v242 = vsel %vm240, %v205, 0
    %244 = vmatprep.subr.bf16.mxu0 0
    %245 = vmatpush1.bf16.msra.mxu0 %v232
    %246 = vmatprep.subr.bf16.mxu0 0
    %247 = vmatpush1.bf16.msra.mxu0 %v233
    %248 = vmatprep.subr.bf16.mxu0 0
    %249 = vmatpush1.bf16.msra.mxu0 %v234
    %250 = vmatprep.subr.bf16.mxu0 0
    %251 = vmatpush1.bf16.msra.mxu0 %v235
    %252 = vmatprep.subr.bf16.mxu0 0
    %253 = vmatpush1.bf16.msra.mxu0 0
    %254 = vmatprep.subr.bf16.mxu0 0
    %255 = vmatpush1.bf16.msra.mxu0 0
    %256 = vmatprep.subr.bf16.mxu0 0
    %257 = vmatpush1.bf16.msra.mxu0 0
    %258 = vmatprep.subr.bf16.mxu0 0
    %259 = vmatpush1.bf16.msra.mxu0 0
    %260 = vmatprep.subr.bf16.mxu0 0
    %261 = vmatpush1.bf16.msra.mxu0 0
    %262 = vmatprep.subr.bf16.mxu0 0
    %263 = vmatpush1.bf16.msra.mxu0 0
    %264 = vmatprep.subr.bf16.mxu0 0
    %265 = vmatpush1.bf16.msra.mxu0 0
    %266 = vmatprep.subr.bf16.mxu0 0
    %267 = vmatpush1.bf16.msra.mxu0 0
    %268 = vmatprep.subr.bf16.mxu0 0
    %269 = vmatpush1.bf16.msra.mxu0 0
    %270 = vmatprep.subr.bf16.mxu0 0
    %271 = vmatpush1.bf16.msra.mxu0 0
    %272 = vmatprep.subr.bf16.mxu0 0
    %273 = vmatpush1.bf16.msra.mxu0 0
    %274 = vmatprep.subr.bf16.mxu0 0
    %275 = vmatpush1.bf16.msra.mxu0 0
    %276 = vmatprep.mubr.bf16.mxu0 0
    %277 = vmatmul.mubr.bf16.gmra.mrb[0].mxu0 %v242
    %v278 = vpop.f32.mrb[0].mxu0
    %v279 = vadd.f32 0.0, %v278
    %v280 = vpop.f32.mrb[0].mxu0
    %v281 = vpop.f32.mrb[0].mxu0
    %v282 = vadd.f32 0.0, %v281
    %v283 = vpop.f32.mrb[0].mxu0
    %284 = vdwg.mxu0
    %v285 = vadd.f32 %v206, %v279
    %v286 = vadd.f32 %v207, %v282
    %287 = vst.msk [vmem:[#allocation3] sm:$0xff] %vm108, %v285
    %288 = vst.msk [vmem:[#allocation3 + $0x8] sm:$0xff] %vm108, %v286
    // Predicated region
    $region34: #{bert_forward.7} parent=1 // pred_check
      %p289 = pneg %p28
    $region35: #{bert_forward.7} parent=1 // pred_check_branch
      %291 = sbr.rel (%p289) target = $region37
    $region36: #{bert_forward.7} parent=1 // pred_region
      %v292 = vld [vmem:[%s0] sm:$0xff]
      %v293 = vld [vmem:[%s0 + $0x8] sm:$0xff]
      %v294 = vld [vmem:[#allocation3] sm:$0xff]
      %v295 = vld [vmem:[#allocation3 + $0x8] sm:$0xff]
      %v296 = vadd.f32 %v292, %v294
      %v297 = vadd.f32 %v293, %v295
      %v298 = vld [vmem:[%s6] sm:$0x1]
      %v300 = vlaneseq
      %v301 = vshrl.u32 %v300, 7
      %v302 = vsub.s32 0, %v301
      %v303 = vrot.slane %v298, %v302
      %v305 = vadd.f32 %v296, %v303
      %v306 = vadd.f32 %v297, %v303
      %307 = vst.msk [vmem:[#allocation4] sm:$0xff] %vm108, %v305
      %308 = vst.msk [vmem:[#allocation4 + $0x8] sm:$0xff] %vm108, %v306
    $region37: #{bert_forward.7} parent=1 // pred_fallthru
      _
    // Predicated region
    $region38: #{bert_forward.7} parent=1 // pred_check
      _
    $region39: #{bert_forward.7} parent=1 // pred_check_branch
      %310 = sbr.rel (0) target = $region41
    $region40: #{bert_forward.7} parent=1 // pred_region
      %s312 = ssub.s32 256, 256
      %313 = vsyncadd [#allocation5], %s312
      %s314 = sshll.u32 [#allocation4], 4
      %s315 = int_to_ptr.vmem [resolvable:$true] %s314
      %320 = dma.vmem_to_hbm [thread:$0]  %s315, 256, %s7, [#allocation5], 128, 128, 8
    $region41: #{bert_forward.7} parent=1 // pred_fallthru
      _
    // Predicated region
    $region42: #{bert_forward.7} parent=1 // pred_check
      _
    $region43: #{bert_forward.7} parent=1 // pred_check_branch
      %322 = sbr.rel (0) target = $region45
    $region44: #{bert_forward.7} parent=1 // pred_region
      %323 = dma.done [#allocation5], 256
    $region45: #{bert_forward.7} parent=1 // pred_fallthru
      _
    %324 = vsyncpa [#allocation5], 1

// kernel: bert_forward.5
$region0: #{bert_forward.5}
  #allocation0 [shape = 'u32[]', space=smem, size = 0x4, offset = 0x4, fixed_abs, tag = 'smem constant byte address 0x4 - core index']
  #allocation1 [shape = 'u32[144,128]{1,0:T(1,128)}', space=vmem, size = 0x12000, scoped, tag = 'internal scratch']
  #allocation2 [shape = 'bf16[16,32]{1,0:T(16,128)(2,1)}', space=vmem, size = 0x1000, scoped, tag = 'scratch operand']
  #allocation3 [shape = 'f32[16,32]{1,0:T(8,128)}', space=vmem, size = 0x2000, scoped, tag = 'scratch operand']
  %s0 = inlined_call_operand.vmem [shape: f32[16,32], index: 0, kind: input, shape index: {}]
  %s1 = inlined_call_operand.vmem [shape: f32[1,32], index: 1, kind: input, shape index: {}]
  %s2 = inlined_call_operand.vmem [shape: f32[1,32], index: 2, kind: input, shape index: {}]
  %s3 = inlined_call_operand.vmem [shape: bf16[32,64], index: 3, kind: input, shape index: {}]
  %s4 = inlined_call_operand.vmem [shape: f32[1,64], index: 4, kind: input, shape index: {}]
  %s5 = inlined_call_operand.vmem [shape: bf16[64,32], index: 5, kind: input, shape index: {}]
  %s6 = inlined_call_operand.vmem [shape: f32[1,32], index: 6, kind: input, shape index: {}]
  %s7 = inlined_call_operand.vmem [shape: f32[16,32], index: 7, kind: output, shape index: {}]
  %s8 = sld [smem:[#allocation0]]
  $region46: #{bert_forward.5} parent=0
    _
  %s10 = ssub.s32 1, %s8
  %s11 = scalar_select 0, %s10, %s8
  // Predicated region
  $region2: #{bert_forward.5} parent=0 // pred_check
    _
  $region3: #{bert_forward.5} parent=0 // pred_check_branch
    %13 = sbr.rel (0) target = $region5
  $region4: #{bert_forward.5} parent=0 // pred_region
    _
  $region5: #{bert_forward.5} parent=0 // pred_fallthru
    _
  // Predicated region
  $region6: #{bert_forward.5} parent=0 // pred_check
    _
  $region7: #{bert_forward.5} parent=0 // pred_check_branch
    %15 = sbr.rel (0) target = $region9
  $region8: #{bert_forward.5} parent=0 // pred_region
    _
  $region9: #{bert_forward.5} parent=0 // pred_fallthru
    _
  // Predicated region
  $region10: #{bert_forward.5} parent=0 // pred_check
    _
  $region11: #{bert_forward.5} parent=0 // pred_check_branch
    %17 = sbr.rel (0) target = $region13
  $region12: #{bert_forward.5} parent=0 // pred_region
    _
  $region13: #{bert_forward.5} parent=0 // pred_fallthru
    _
  // Predicated region
  $region14: #{bert_forward.5} parent=0 // pred_check
    _
  $region15: #{bert_forward.5} parent=0 // pred_check_branch
    %19 = sbr.rel (0) target = $region17
  $region16: #{bert_forward.5} parent=0 // pred_region
    _
  $region17: #{bert_forward.5} parent=0 // pred_fallthru
    _
  // Predicated region
  $region18: #{bert_forward.5} parent=0 // pred_check
    _
  $region19: #{bert_forward.5} parent=0 // pred_check_branch
    %21 = sbr.rel (0) target = $region21
  $region20: #{bert_forward.5} parent=0 // pred_region
    _
  $region21: #{bert_forward.5} parent=0 // pred_fallthru
    _
  // Predicated region
  $region22: #{bert_forward.5} parent=0 // pred_check
    _
  $region23: #{bert_forward.5} parent=0 // pred_check_branch
    %23 = sbr.rel (0) target = $region25
  $region24: #{bert_forward.5} parent=0 // pred_region
    _
  $region25: #{bert_forward.5} parent=0 // pred_fallthru
    _
  // Predicated region
  $region26: #{bert_forward.5} parent=0 // pred_check
    _
  $region27: #{bert_forward.5} parent=0 // pred_check_branch
    %25 = sbr.rel (0) target = $region29
  $region28: #{bert_forward.5} parent=0 // pred_region
    _
  $region29: #{bert_forward.5} parent=0 // pred_fallthru
    _
  %p27 = scmp.eq.s32.totalorder 0, 0
  // Predicated region
  $region30: #{bert_forward.5} parent=0 // pred_check
    %p28 = pneg %p27
  $region31: #{bert_forward.5} parent=0 // pred_check_branch
    %30 = sbr.rel (%p28) target = $region33
  $region32: #{bert_forward.5} parent=0 // pred_region
    %v31 = vld [vmem:[%s0] sm:$0xff]
    %v32 = vld [vmem:[%s0 + $0x8] sm:$0xff]
    %v33 = vld [vmem:[%s1] sm:$0x1]
    %v34 = vld [vmem:[%s2] sm:$0x1]
    %vm35 = vcmask 261120
    %v36 = vsel %vm35, %v31, 0.0
    %37 = vadd.xlane.f32.xlu0 %v36
    %v38 = vpop.xlane.xlu0 %37
    %v39 = vsel %vm35, %v32, 0.0
    %40 = vadd.xlane.f32.xlu0 %v39
    %v41 = vpop.xlane.xlu0 %40
    %v42 = vrcp.pop 32.0
    %v43 = vmul.f32 %v38, %v42
    %v44 = vmul.f32 %v41, %v42
    %v45 = vsub.f32 %v31, %v43
    %v46 = vsub.f32 %v32, %v44
    %v47 = vmul.f32 %v45, %v45
    %v48 = vmul.f32 %v46, %v46
    %v49 = vsel %vm35, %v47, 0.0
    %50 = vadd.xlane.f32.xlu0 %v49
    %v51 = vpop.xlane.xlu0 %50
    %v52 = vsel %vm35, %v48, 0.0
    %53 = vadd.xlane.f32.xlu0 %v52
    %v54 = vpop.xlane.xlu0 %53
    %v55 = vmul.f32 %v51, %v42
    %v56 = vmul.f32 %v54, %v42
    %v57 = vadd.f32 %v55, 1e-05
    %v58 = vadd.f32 %v56, 1e-05
    %v59 = vrsqrt.pop %v57
    %v60 = vrsqrt.pop %v58
    %v61 = vmul.f32 %v45, %v59
    %v62 = vmul.f32 %v46, %v60
    %v64 = vlaneseq
    %v65 = vshrl.u32 %v64, 7
    %v66 = vsub.s32 0, %v65
    %v67 = vrot.slane %v33, %v66
    %v69 = vmul.f32 %v61, %v67
    %v70 = vmul.f32 %v62, %v67
    %v72 = vlaneseq
    %v73 = vshrl.u32 %v72, 7
    %v74 = vsub.s32 0, %v73
    %v75 = vrot.slane %v34, %v74
    %v77 = vadd.f32 %v69, %v75
    %v78 = vadd.f32 %v70, %v75
    %v79 = vpack.c.bf16 %v78, %v77
    %80 = vst.msk [vmem:[#allocation2] sm:$0xff] %vm35, %v79
    %81 = vst.msk [vmem:[#allocation3] sm:$0xff] %vm35, 0.0
    %82 = vst.msk [vmem:[#allocation3 + $0x8] sm:$0xff] %vm35, 0.0
  $region33: #{bert_forward.5} parent=0 // pred_fallthru
    _
  %v83 = vld [vmem:[#allocation2] sm:$0xff]
  %v84 = vld [vmem:[%s3] sm:$0xf]
  %v85 = vld [vmem:[%s3 + $0x4] sm:$0xf]
  %v86 = vld [vmem:[%s3 + $0x8] sm:$0xf]
  %v87 = vld [vmem:[%s3 + $0xc] sm:$0xf]
  %v88 = vld [vmem:[%s4] sm:$0x1]
  %v90 = vlaneseq
  %v91 = vshrl.u32 %v90, 7
  %v92 = vsub.s32 0, %v91
  %v93 = vrot.slane %v88, %v92
  %v99 = vunpack.c.l.b16 %v84
  %v100 = vunpack.c.l.b16 %v85
  %v101 = vunpack.c.l.b16 %v86
  %v102 = vunpack.c.l.b16 %v87
  %v103 = vpack.c.b16 %v100, %v99
  %v104 = vpack.c.b16 %v102, %v101
  %vm107 = vcmask 261120
  %v109 = vsel %vm107, %v83, 0
  %111 = vmatprep.subr.bf16.mxu0 0
  %112 = vmatpush1.bf16.msra.mxu0 %v103
  %113 = vmatprep.subr.bf16.mxu0 0
  %114 = vmatpush1.bf16.msra.mxu0 %v104
  %115 = vmatprep.subr.bf16.mxu0 0
  %116 = vmatpush1.bf16.msra.mxu0 0
  %117 = vmatprep.subr.bf16.mxu0 0
  %118 = vmatpush1.bf16.msra.mxu0 0
  %119 = vmatprep.subr.bf16.mxu0 0
  %120 = vmatpush1.bf16.msra.mxu0 0
  %121 = vmatprep.subr.bf16.mxu0 0
  %122 = vmatpush1.bf16.msra.mxu0 0
  %123 = vmatprep.subr.bf16.mxu0 0
  %124 = vmatpush1.bf16.msra.mxu0 0
  %125 = vmatprep.subr.bf16.mxu0 0
  %126 = vmatpush1.bf16.msra.mxu0 0
  %127 = vmatprep.subr.bf16.mxu0 0
  %128 = vmatpush1.bf16.msra.mxu0 0
  %129 = vmatprep.subr.bf16.mxu0 0
  %130 = vmatpush1.bf16.msra.mxu0 0
  %131 = vmatprep.subr.bf16.mxu0 0
  %132 = vmatpush1.bf16.msra.mxu0 0
  %133 = vmatprep.subr.bf16.mxu0 0
  %134 = vmatpush1.bf16.msra.mxu0 0
  %135 = vmatprep.subr.bf16.mxu0 0
  %136 = vmatpush1.bf16.msra.mxu0 0
  %137 = vmatprep.subr.bf16.mxu0 0
  %138 = vmatpush1.bf16.msra.mxu0 0
  %139 = vmatprep.subr.bf16.mxu0 0
  %140 = vmatpush1.bf16.msra.mxu0 0
  %141 = vmatprep.subr.bf16.mxu0 0
  %142 = vmatpush1.bf16.msra.mxu0 0
  %143 = vmatprep.mubr.bf16.mxu0 0
  %144 = vmatmul.mubr.bf16.gmra.mrb[0].mxu0 %v109
  %v145 = vpop.f32.mrb[0].mxu0
  %v146 = vadd.f32 %v93, %v145
  %v147 = vpop.f32.mrb[0].mxu0
  %v148 = vpop.f32.mrb[0].mxu0
  %v149 = vadd.f32 %v93, %v148
  %v150 = vpop.f32.mrb[0].mxu0
  %151 = vdwg.mxu0
  %v152 = vmul.f32 %v146, 0.5
  %v153 = vmul.f32 %v149, 0.5
  %v154 = vmul.f32 %v146, 0.70710677
  %v155 = vmul.f32 %v149, 0.70710677
  %v156 = vand.u32 2147483647, %v154
  %v157 = vand.u32 2147483647, %v155
  %v158 = vmul.f32 %v156, 0.3275911
  %v159 = vmul.f32 %v157, 0.3275911
  %v160 = vadd.f32 %v158, 1.0
  %v161 = vadd.f32 %v159, 1.0
  %v162 = vrcp.pop %v160
  %v163 = vrcp.pop %v161
  %v164 = vmul.f32 %v162, 1.0614054
  %v165 = vmul.f32 %v163, 1.0614054
  %v166 = vadd.f32 %v164, -1.4531521
  %v167 = vadd.f32 %v165, -1.4531521
  %v168 = vmul.f32 %v166, %v162
  %v169 = vmul.f32 %v167, %v163
  %v170 = vadd.f32 %v168, 1.4214138
  %v171 = vadd.f32 %v169, 1.4214138
  %v172 = vmul.f32 %v170, %v162
  %v173 = vmul.f32 %v171, %v163
  %v174 = vadd.f32 %v172, -0.28449672
  %v175 = vadd.f32 %v173, -0.28449672
  %v176 = vmul.f32 %v174, %v162
  %v177 = vmul.f32 %v175, %v163
  %v178 = vadd.f32 %v176, 0.2548296
  %v179 = vadd.f32 %v177, 0.2548296
  %v180 = vmul.f32 %v178, %v162
  %v181 = vmul.f32 %v179, %v163
  %v182 = vsub.f32 0.0, %v156
  %v183 = vsub.f32 0.0, %v157
  %v184 = vmul.f32 %v182, %v156
  %v185 = vmul.f32 %v183, %v157
  %v186 = vmul.f32 %v184, 1.442695
  %v187 = vpow.pop %v186
  %v188 = vmul.f32 %v185, 1.442695
  %v189 = vpow.pop %v188
  %v190 = vmul.f32 %v180, %v187
  %v191 = vmul.f32 %v181, %v189
  %v192 = vsub.f32 1.0, %v190
  %v193 = vsub.f32 1.0, %v191
  %vm194 = vcmp.lt.f32.partialorder %v154, 0.0
  %vm195 = vcmp.lt.f32.partialorder %v155, 0.0
  %v196 = vsub.f32 0.0, %v192
  %v197 = vsub.f32 0.0, %v193
  %v198 = vsel %vm194, %v196, %v192
  %v199 = vsel %vm195, %v197, %v193
  %v200 = vadd.f32 %v198, 1.0
  %v201 = vadd.f32 %v199, 1.0
  %v202 = vmul.f32 %v152, %v200
  %v203 = vmul.f32 %v153, %v201
  %v204 = vpack.c.bf16 %v203, %v202
  %v205 = vld [vmem:[#allocation3] sm:$0xff]
  %v206 = vld [vmem:[#allocation3 + $0x8] sm:$0xff]
  %v207 = vld [vmem:[%s5] sm:$0xf]
  %v208 = vld [vmem:[%s5 + $0x4] sm:$0xf]
  %v209 = vld [vmem:[%s5 + $0x8] sm:$0xf]
  %v210 = vld [vmem:[%s5 + $0xc] sm:$0xf]
  %v211 = vld [vmem:[%s5 + $0x10] sm:$0xf]
  %v212 = vld [vmem:[%s5 + $0x14] sm:$0xf]
  %v213 = vld [vmem:[%s5 + $0x18] sm:$0xf]
  %v214 = vld [vmem:[%s5 + $0x1c] sm:$0xf]
  %v223 = vunpack.c.l.b16 %v207
  %v224 = vunpack.c.l.b16 %v208
  %v225 = vunpack.c.l.b16 %v209
  %v226 = vunpack.c.l.b16 %v210
  %v227 = vunpack.c.l.b16 %v211
  %v228 = vunpack.c.l.b16 %v212
  %v229 = vunpack.c.l.b16 %v213
  %v230 = vunpack.c.l.b16 %v214
  %v231 = vpack.c.b16 %v224, %v223
  %v232 = vpack.c.b16 %v226, %v225
  %v233 = vpack.c.b16 %v228, %v227
  %v234 = vpack.c.b16 %v230, %v229
  %vm239 = vcmask 523264
  %v241 = vsel %vm239, %v204, 0
  %243 = vmatprep.subr.bf16.mxu0 0
  %244 = vmatpush1.bf16.msra.mxu0 %v231
  %245 = vmatprep.subr.bf16.mxu0 0
  %246 = vmatpush1.bf16.msra.mxu0 %v232
  %247 = vmatprep.subr.bf16.mxu0 0
  %248 = vmatpush1.bf16.msra.mxu0 %v233
  %249 = vmatprep.subr.bf16.mxu0 0
  %250 = vmatpush1.bf16.msra.mxu0 %v234
  %251 = vmatprep.subr.bf16.mxu0 0
  %252 = vmatpush1.bf16.msra.mxu0 0
  %253 = vmatprep.subr.bf16.mxu0 0
  %254 = vmatpush1.bf16.msra.mxu0 0
  %255 = vmatprep.subr.bf16.mxu0 0
  %256 = vmatpush1.bf16.msra.mxu0 0
  %257 = vmatprep.subr.bf16.mxu0 0
  %258 = vmatpush1.bf16.msra.mxu0 0
  %259 = vmatprep.subr.bf16.mxu0 0
  %260 = vmatpush1.bf16.msra.mxu0 0
  %261 = vmatprep.subr.bf16.mxu0 0
  %262 = vmatpush1.bf16.msra.mxu0 0
  %263 = vmatprep.subr.bf16.mxu0 0
  %264 = vmatpush1.bf16.msra.mxu0 0
  %265 = vmatprep.subr.bf16.mxu0 0
  %266 = vmatpush1.bf16.msra.mxu0 0
  %267 = vmatprep.subr.bf16.mxu0 0
  %268 = vmatpush1.bf16.msra.mxu0 0
  %269 = vmatprep.subr.bf16.mxu0 0
  %270 = vmatpush1.bf16.msra.mxu0 0
  %271 = vmatprep.subr.bf16.mxu0 0
  %272 = vmatpush1.bf16.msra.mxu0 0
  %273 = vmatprep.subr.bf16.mxu0 0
  %274 = vmatpush1.bf16.msra.mxu0 0
  %275 = vmatprep.mubr.bf16.mxu0 0
  %276 = vmatmul.mubr.bf16.gmra.mrb[0].mxu0 %v241
  %v277 = vpop.f32.mrb[0].mxu0
  %v278 = vadd.f32 0.0, %v277
  %v279 = vpop.f32.mrb[0].mxu0
  %v280 = vpop.f32.mrb[0].mxu0
  %v281 = vadd.f32 0.0, %v280
  %v282 = vpop.f32.mrb[0].mxu0
  %283 = vdwg.mxu0
  %v284 = vadd.f32 %v205, %v278
  %v285 = vadd.f32 %v206, %v281
  %286 = vst.msk [vmem:[#allocation3] sm:$0xff] %vm107, %v284
  %287 = vst.msk [vmem:[#allocation3 + $0x8] sm:$0xff] %vm107, %v285
  // Predicated region
  $region34: #{bert_forward.5} parent=0 // pred_check
    %p288 = pneg %p27
  $region35: #{bert_forward.5} parent=0 // pred_check_branch
    %290 = sbr.rel (%p288) target = $region37
  $region36: #{bert_forward.5} parent=0 // pred_region
    %v291 = vld [vmem:[%s0] sm:$0xff]
    %v292 = vld [vmem:[%s0 + $0x8] sm:$0xff]
    %v293 = vld [vmem:[#allocation3] sm:$0xff]
    %v294 = vld [vmem:[#allocation3 + $0x8] sm:$0xff]
    %v295 = vadd.f32 %v291, %v293
    %v296 = vadd.f32 %v292, %v294
    %v297 = vld [vmem:[%s6] sm:$0x1]
    %v299 = vlaneseq
    %v300 = vshrl.u32 %v299, 7
    %v301 = vsub.s32 0, %v300
    %v302 = vrot.slane %v297, %v301
    %v304 = vadd.f32 %v295, %v302
    %v305 = vadd.f32 %v296, %v302
    %306 = vst.msk [vmem:[%s7] sm:$0xff] %vm107, %v304
    %307 = vst.msk [vmem:[%s7 + $0x8] sm:$0xff] %vm107, %v305
  $region37: #{bert_forward.5} parent=0 // pred_fallthru
    _
  // Predicated region
  $region38: #{bert_forward.5} parent=0 // pred_check
    _
  $region39: #{bert_forward.5} parent=0 // pred_check_branch
    %309 = sbr.rel (0) target = $region41
  $region40: #{bert_forward.5} parent=0 // pred_region
    _
  $region41: #{bert_forward.5} parent=0 // pred_fallthru
    _
  // Predicated region
  $region42: #{bert_forward.5} parent=0 // pred_check
    _
  $region43: #{bert_forward.5} parent=0 // pred_check_branch
    %311 = sbr.rel (0) target = $region45
  $region44: #{bert_forward.5} parent=0 // pred_region
    _
  $region45: #{bert_forward.5} parent=0 // pred_fallthru
    _

// kernel: bert_forward.4
$region0: #{bert_forward.4}
  #allocation0 [shape = 'u32[]', space=smem, size = 0x4, offset = 0x4, fixed_abs, tag = 'smem constant byte address 0x4 - core index']
  #allocation1 [shape = 'u32[144,128]{1,0:T(1,128)}', space=vmem, size = 0x12000, scoped, tag = 'internal scratch']
  #allocation2 [shape = 'bf16[16,32]{1,0:T(16,128)(2,1)}', space=vmem, size = 0x1000, scoped, tag = 'scratch operand']
  %s0 = inlined_call_operand.vmem [shape: f32[16,32], index: 0, kind: input, shape index: {}]
  %s1 = inlined_call_operand.vmem [shape: f32[2,1,8], index: 1, kind: input, shape index: {}]
  %s2 = inlined_call_operand.vmem [shape: f32[1,32], index: 2, kind: input, shape index: {}]
  %s3 = inlined_call_operand.vmem [shape: f32[1,32], index: 3, kind: input, shape index: {}]
  %s4 = inlined_call_operand.vmem [shape: bf16[32,32], index: 4, kind: input, shape index: {}]
  %s5 = inlined_call_operand.vmem [shape: bf16[32,32], index: 5, kind: input, shape index: {}]
  %s6 = inlined_call_operand.vmem [shape: bf16[32,32], index: 6, kind: input, shape index: {}]
  %s7 = inlined_call_operand.vmem [shape: f32[1,32], index: 7, kind: input, shape index: {}]
  %s8 = inlined_call_operand.vmem [shape: f32[1,32], index: 8, kind: input, shape index: {}]
  %s9 = inlined_call_operand.vmem [shape: f32[1,32], index: 9, kind: input, shape index: {}]
  %s10 = inlined_call_operand.vmem [shape: bf16[32,32], index: 10, kind: input, shape index: {}]
  %s11 = inlined_call_operand.vmem [shape: f32[1,32], index: 11, kind: input, shape index: {}]
  %s12 = inlined_call_operand.vmem [shape: f32[16,32], index: 12, kind: output, shape index: {}]
  %s13 = sld [smem:[#allocation0]]
  $region58: #{bert_forward.4} parent=0
    _
  %s15 = ssub.s32 1, %s13
  %s16 = scalar_select 0, %s15, %s13
  // Predicated region
  $region2: #{bert_forward.4} parent=0 // pred_check
    _
  $region3: #{bert_forward.4} parent=0 // pred_check_branch
    %18 = sbr.rel (0) target = $region5
  $region4: #{bert_forward.4} parent=0 // pred_region
    _
  $region5: #{bert_forward.4} parent=0 // pred_fallthru
    _
  // Predicated region
  $region6: #{bert_forward.4} parent=0 // pred_check
    _
  $region7: #{bert_forward.4} parent=0 // pred_check_branch
    %20 = sbr.rel (0) target = $region9
  $region8: #{bert_forward.4} parent=0 // pred_region
    _
  $region9: #{bert_forward.4} parent=0 // pred_fallthru
    _
  // Predicated region
  $region10: #{bert_forward.4} parent=0 // pred_check
    _
  $region11: #{bert_forward.4} parent=0 // pred_check_branch
    %22 = sbr.rel (0) target = $region13
  $region12: #{bert_forward.4} parent=0 // pred_region
    _
  $region13: #{bert_forward.4} parent=0 // pred_fallthru
    _
  // Predicated region
  $region14: #{bert_forward.4} parent=0 // pred_check
    _
  $region15: #{bert_forward.4} parent=0 // pred_check_branch
    %24 = sbr.rel (0) target = $region17
  $region16: #{bert_forward.4} parent=0 // pred_region
    _
  $region17: #{bert_forward.4} parent=0 // pred_fallthru
    _
  // Predicated region
  $region18: #{bert_forward.4} parent=0 // pred_check
    _
  $region19: #{bert_forward.4} parent=0 // pred_check_branch
    %26 = sbr.rel (0) target = $region21
  $region20: #{bert_forward.4} parent=0 // pred_region
    _
  $region21: #{bert_forward.4} parent=0 // pred_fallthru
    _
  // Predicated region
  $region22: #{bert_forward.4} parent=0 // pred_check
    _
  $region23: #{bert_forward.4} parent=0 // pred_check_branch
    %28 = sbr.rel (0) target = $region25
  $region24: #{bert_forward.4} parent=0 // pred_region
    _
  $region25: #{bert_forward.4} parent=0 // pred_fallthru
    _
  // Predicated region
  $region26: #{bert_forward.4} parent=0 // pred_check
    _
  $region27: #{bert_forward.4} parent=0 // pred_check_branch
    %30 = sbr.rel (0) target = $region29
  $region28: #{bert_forward.4} parent=0 // pred_region
    _
  $region29: #{bert_forward.4} parent=0 // pred_fallthru
    _
  // Predicated region
  $region30: #{bert_forward.4} parent=0 // pred_check
    _
  $region31: #{bert_forward.4} parent=0 // pred_check_branch
    %32 = sbr.rel (0) target = $region33
  $region32: #{bert_forward.4} parent=0 // pred_region
    _
  $region33: #{bert_forward.4} parent=0 // pred_fallthru
    _
  // Predicated region
  $region34: #{bert_forward.4} parent=0 // pred_check
    _
  $region35: #{bert_forward.4} parent=0 // pred_check_branch
    %34 = sbr.rel (0) target = $region37
  $region36: #{bert_forward.4} parent=0 // pred_region
    _
  $region37: #{bert_forward.4} parent=0 // pred_fallthru
    _
  // Predicated region
  $region38: #{bert_forward.4} parent=0 // pred_check
    _
  $region39: #{bert_forward.4} parent=0 // pred_check_branch
    %36 = sbr.rel (0) target = $region41
  $region40: #{bert_forward.4} parent=0 // pred_region
    _
  $region41: #{bert_forward.4} parent=0 // pred_fallthru
    _
  // Predicated region
  $region42: #{bert_forward.4} parent=0 // pred_check
    _
  $region43: #{bert_forward.4} parent=0 // pred_check_branch
    %38 = sbr.rel (0) target = $region45
  $region44: #{bert_forward.4} parent=0 // pred_region
    _
  $region45: #{bert_forward.4} parent=0 // pred_fallthru
    _
  // Predicated region
  $region46: #{bert_forward.4} parent=0 // pred_check
    _
  $region47: #{bert_forward.4} parent=0 // pred_check_branch
    %40 = sbr.rel (0) target = $region49
  $region48: #{bert_forward.4} parent=0 // pred_region
    _
  $region49: #{bert_forward.4} parent=0 // pred_fallthru
    _
  %v42 = vld [vmem:[%s0] sm:$0xff]
  %v43 = vld [vmem:[%s0 + $0x8] sm:$0xff]
  %v44 = vld [vmem:[%s2] sm:$0x1]
  %v45 = vld [vmem:[%s3] sm:$0x1]
  %vm46 = vcmask 261120
  %v47 = vsel %vm46, %v42, 0.0
  %48 = vadd.xlane.f32.xlu0 %v47
  %v49 = vpop.xlane.xlu0 %48
  %v50 = vsel %vm46, %v43, 0.0
  %51 = vadd.xlane.f32.xlu0 %v50
  %v52 = vpop.xlane.xlu0 %51
  %v53 = vrcp.pop 32.0
  %v54 = vmul.f32 %v49, %v53
  %v55 = vmul.f32 %v52, %v53
  %v56 = vsub.f32 %v42, %v54
  %v57 = vsub.f32 %v43, %v55
  %v58 = vmul.f32 %v56, %v56
  %v59 = vmul.f32 %v57, %v57
  %v60 = vsel %vm46, %v58, 0.0
  %61 = vadd.xlane.f32.xlu0 %v60
  %v62 = vpop.xlane.xlu0 %61
  %v63 = vsel %vm46, %v59, 0.0
  %64 = vadd.xlane.f32.xlu0 %v63
  %v65 = vpop.xlane.xlu0 %64
  %v66 = vmul.f32 %v62, %v53
  %v67 = vmul.f32 %v65, %v53
  %v68 = vadd.f32 %v66, 1e-05
  %v69 = vadd.f32 %v67, 1e-05
  %v70 = vrsqrt.pop %v68
  %v71 = vrsqrt.pop %v69
  %v72 = vmul.f32 %v56, %v70
  %v73 = vmul.f32 %v57, %v71
  %v75 = vlaneseq
  %v76 = vshrl.u32 %v75, 7
  %v77 = vsub.s32 0, %v76
  %v78 = vrot.slane %v44, %v77
  %v80 = vmul.f32 %v72, %v78
  %v81 = vmul.f32 %v73, %v78
  %v83 = vlaneseq
  %v84 = vshrl.u32 %v83, 7
  %v85 = vsub.s32 0, %v84
  %v86 = vrot.slane %v45, %v85
  %v88 = vadd.f32 %v80, %v86
  %v89 = vadd.f32 %v81, %v86
  %v90 = vpack.c.bf16 %v89, %v88
  %v91 = vld [vmem:[%s4] sm:$0xf]
  %v92 = vld [vmem:[%s4 + $0x4] sm:$0xf]
  %v93 = vld [vmem:[%s4 + $0x8] sm:$0xf]
  %v94 = vld [vmem:[%s4 + $0xc] sm:$0xf]
  %v95 = vld [vmem:[%s7] sm:$0x1]
  %v97 = vlaneseq
  %v98 = vshrl.u32 %v97, 7
  %v99 = vsub.s32 0, %v98
  %v100 = vrot.slane %v95, %v99
  %v106 = vunpack.c.l.b16 %v91
  %v107 = vunpack.c.l.b16 %v92
  %v108 = vunpack.c.l.b16 %v93
  %v109 = vunpack.c.l.b16 %v94
  %v110 = vpack.c.b16 %v107, %v106
  %v111 = vpack.c.b16 %v109, %v108
  %v115 = vsel %vm46, %v90, 0
  %117 = vmatprep.subr.bf16.mxu0 0
  %118 = vmatpush1.bf16.msra.mxu0 %v110
  %119 = vmatprep.subr.bf16.mxu0 0
  %120 = vmatpush1.bf16.msra.mxu0 %v111
  %121 = vmatprep.subr.bf16.mxu0 0
  %122 = vmatpush1.bf16.msra.mxu0 0
  %123 = vmatprep.subr.bf16.mxu0 0
  %124 = vmatpush1.bf16.msra.mxu0 0
  %125 = vmatprep.subr.bf16.mxu0 0
  %126 = vmatpush1.bf16.msra.mxu0 0
  %127 = vmatprep.subr.bf16.mxu0 0
  %128 = vmatpush1.bf16.msra.mxu0 0
  %129 = vmatprep.subr.bf16.mxu0 0
  %130 = vmatpush1.bf16.msra.mxu0 0
  %131 = vmatprep.subr.bf16.mxu0 0
  %132 = vmatpush1.bf16.msra.mxu0 0
  %133 = vmatprep.subr.bf16.mxu0 0
  %134 = vmatpush1.bf16.msra.mxu0 0
  %135 = vmatprep.subr.bf16.mxu0 0
  %136 = vmatpush1.bf16.msra.mxu0 0
  %137 = vmatprep.subr.bf16.mxu0 0
  %138 = vmatpush1.bf16.msra.mxu0 0
  %139 = vmatprep.subr.bf16.mxu0 0
  %140 = vmatpush1.bf16.msra.mxu0 0
  %141 = vmatprep.subr.bf16.mxu0 0
  %142 = vmatpush1.bf16.msra.mxu0 0
  %143 = vmatprep.subr.bf16.mxu0 0
  %144 = vmatpush1.bf16.msra.mxu0 0
  %145 = vmatprep.subr.bf16.mxu0 0
  %146 = vmatpush1.bf16.msra.mxu0 0
  %147 = vmatprep.subr.bf16.mxu0 0
  %148 = vmatpush1.bf16.msra.mxu0 0
  %149 = vmatprep.mubr.bf16.mxu0 0
  %150 = vmatmul.mubr.bf16.gmra.mrb[0].mxu0 %v115
  %v151 = vpop.f32.mrb[0].mxu0
  %v152 = vadd.f32 %v100, %v151
  %v153 = vpop.f32.mrb[0].mxu0
  %v154 = vpop.f32.mrb[0].mxu0
  %v155 = vadd.f32 %v100, %v154
  %v156 = vpop.f32.mrb[0].mxu0
  %157 = vdwg.mxu0
  %v158 = vmul.f32 %v152, 0.35355338
  %v159 = vmul.f32 %v155, 0.35355338
  %v160 = vld [vmem:[%s5] sm:$0xf]
  %v161 = vld [vmem:[%s5 + $0x4] sm:$0xf]
  %v162 = vld [vmem:[%s5 + $0x8] sm:$0xf]
  %v163 = vld [vmem:[%s5 + $0xc] sm:$0xf]
  %v164 = vld [vmem:[%s8] sm:$0x1]
  %v166 = vlaneseq
  %v167 = vshrl.u32 %v166, 7
  %v168 = vsub.s32 0, %v167
  %v169 = vrot.slane %v164, %v168
  %v175 = vunpack.c.l.b16 %v160
  %v176 = vunpack.c.l.b16 %v161
  %v177 = vunpack.c.l.b16 %v162
  %v178 = vunpack.c.l.b16 %v163
  %v179 = vpack.c.b16 %v176, %v175
  %v180 = vpack.c.b16 %v178, %v177
  %183 = vmatprep.subr.bf16.mxu0 0
  %184 = vmatpush1.bf16.msra.mxu0 %v179
  %185 = vmatprep.subr.bf16.mxu0 0
  %186 = vmatpush1.bf16.msra.mxu0 %v180
  %187 = vmatprep.subr.bf16.mxu0 0
  %188 = vmatpush1.bf16.msra.mxu0 0
  %189 = vmatprep.subr.bf16.mxu0 0
  %190 = vmatpush1.bf16.msra.mxu0 0
  %191 = vmatprep.subr.bf16.mxu0 0
  %192 = vmatpush1.bf16.msra.mxu0 0
  %193 = vmatprep.subr.bf16.mxu0 0
  %194 = vmatpush1.bf16.msra.mxu0 0
  %195 = vmatprep.subr.bf16.mxu0 0
  %196 = vmatpush1.bf16.msra.mxu0 0
  %197 = vmatprep.subr.bf16.mxu0 0
  %198 = vmatpush1.bf16.msra.mxu0 0
  %199 = vmatprep.subr.bf16.mxu0 0
  %200 = vmatpush1.bf16.msra.mxu0 0
  %201 = vmatprep.subr.bf16.mxu0 0
  %202 = vmatpush1.bf16.msra.mxu0 0
  %203 = vmatprep.subr.bf16.mxu0 0
  %204 = vmatpush1.bf16.msra.mxu0 0
  %205 = vmatprep.subr.bf16.mxu0 0
  %206 = vmatpush1.bf16.msra.mxu0 0
  %207 = vmatprep.subr.bf16.mxu0 0
  %208 = vmatpush1.bf16.msra.mxu0 0
  %209 = vmatprep.subr.bf16.mxu0 0
  %210 = vmatpush1.bf16.msra.mxu0 0
  %211 = vmatprep.subr.bf16.mxu0 0
  %212 = vmatpush1.bf16.msra.mxu0 0
  %213 = vmatprep.subr.bf16.mxu0 0
  %214 = vmatpush1.bf16.msra.mxu0 0
  %215 = vmatprep.mubr.bf16.mxu0 0
  %216 = vmatmul.mubr.bf16.gmra.mrb[0].mxu0 %v115
  %v217 = vpop.f32.mrb[0].mxu0
  %v218 = vadd.f32 %v169, %v217
  %v219 = vpop.f32.mrb[0].mxu0
  %v220 = vpop.f32.mrb[0].mxu0
  %v221 = vadd.f32 %v169, %v220
  %v222 = vpop.f32.mrb[0].mxu0
  %223 = vdwg.mxu0
  %v224 = vld [vmem:[%s6] sm:$0xf]
  %v225 = vld [vmem:[%s6 + $0x4] sm:$0xf]
  %v226 = vld [vmem:[%s6 + $0x8] sm:$0xf]
  %v227 = vld [vmem:[%s6 + $0xc] sm:$0xf]
  %v228 = vld [vmem:[%s9] sm:$0x1]
  %v230 = vlaneseq
  %v231 = vshrl.u32 %v230, 7
  %v232 = vsub.s32 0, %v231
  %v233 = vrot.slane %v228, %v232
  %v239 = vunpack.c.l.b16 %v224
  %v240 = vunpack.c.l.b16 %v225
  %v241 = vunpack.c.l.b16 %v226
  %v242 = vunpack.c.l.b16 %v227
  %v243 = vpack.c.b16 %v240, %v239
  %v244 = vpack.c.b16 %v242, %v241
  %247 = vmatprep.subr.bf16.mxu0 0
  %248 = vmatpush1.bf16.msra.mxu0 %v243
  %249 = vmatprep.subr.bf16.mxu0 0
  %250 = vmatpush1.bf16.msra.mxu0 %v244
  %251 = vmatprep.subr.bf16.mxu0 0
  %252 = vmatpush1.bf16.msra.mxu0 0
  %253 = vmatprep.subr.bf16.mxu0 0
  %254 = vmatpush1.bf16.msra.mxu0 0
  %255 = vmatprep.subr.bf16.mxu0 0
  %256 = vmatpush1.bf16.msra.mxu0 0
  %257 = vmatprep.subr.bf16.mxu0 0
  %258 = vmatpush1.bf16.msra.mxu0 0
  %259 = vmatprep.subr.bf16.mxu0 0
  %260 = vmatpush1.bf16.msra.mxu0 0
  %261 = vmatprep.subr.bf16.mxu0 0
  %262 = vmatpush1.bf16.msra.mxu0 0
  %263 = vmatprep.subr.bf16.mxu0 0
  %264 = vmatpush1.bf16.msra.mxu0 0
  %265 = vmatprep.subr.bf16.mxu0 0
  %266 = vmatpush1.bf16.msra.mxu0 0
  %267 = vmatprep.subr.bf16.mxu0 0
  %268 = vmatpush1.bf16.msra.mxu0 0
  %269 = vmatprep.subr.bf16.mxu0 0
  %270 = vmatpush1.bf16.msra.mxu0 0
  %271 = vmatprep.subr.bf16.mxu0 0
  %272 = vmatpush1.bf16.msra.mxu0 0
  %273 = vmatprep.subr.bf16.mxu0 0
  %274 = vmatpush1.bf16.msra.mxu0 0
  %275 = vmatprep.subr.bf16.mxu0 0
  %276 = vmatpush1.bf16.msra.mxu0 0
  %277 = vmatprep.subr.bf16.mxu0 0
  %278 = vmatpush1.bf16.msra.mxu0 0
  %279 = vmatprep.mubr.bf16.mxu0 0
  %280 = vmatmul.mubr.bf16.gmra.mrb[0].mxu0 %v115
  %v281 = vpop.f32.mrb[0].mxu0
  %v282 = vadd.f32 %v233, %v281
  %v283 = vpop.f32.mrb[0].mxu0
  %v284 = vpop.f32.mrb[0].mxu0
  %v285 = vadd.f32 %v233, %v284
  %v286 = vpop.f32.mrb[0].mxu0
  %287 = vdwg.mxu0
  %v288 = vpack.c.bf16 %v159, %v158
  %v289 = vpack.c.bf16 %v221, %v218
  %v290 = vpack.c.bf16 %v285, %v282
  %v291 = vld [vmem:[%s1] sm:$0x1]
  %v292 = vld [vmem:[%s1 + $0x1] sm:$0x1]
  %v294 = vunpack.c.l.b16 %v288
  %v295 = vunpack.c.h.b16 %v288
  %v296 = vpack.c.b16 %v294, %v294
  %v297 = vpack.c.b16 %v295, %v295
  %v299 = vunpack.c.l.b16 %v289
  %v300 = vunpack.c.h.b16 %v289
  %v301 = vpack.c.b16 %v299, %v299
  %v302 = vpack.c.b16 %v300, %v300
  %v304 = vunpack.c.l.b16 %v290
  %v305 = vunpack.c.h.b16 %v290
  %v306 = vpack.c.b16 %v304, %v304
  %v307 = vpack.c.b16 %v305, %v305
  %v310 = vlaneseq
  %v311 = vshrl.u32 %v310, 7
  %v312 = vsub.s32 0, %v311
  %v313 = vrot.slane %v291, %v312
  %v314 = vlaneseq
  %v315 = vshrl.u32 %v314, 7
  %v316 = vsub.s32 0, %v315
  %v317 = vrot.slane %v292, %v316
  %vm320 = vcmask 64512
  %v322 = vsel %vm320, %v296, 0
  %v325 = vsel %vm320, %v301, 0
  %327 = vmatprep.subr.bf16.mxu0 0
  %328 = vmatpush1.bf16.xpose.msra.mxu0 %v325
  %329 = vmatprep.subr.bf16.mxu0 0
  %330 = vmatpush1.bf16.xpose.msra.mxu0 0
  %331 = vmatprep.subr.bf16.mxu0 0
  %332 = vmatpush1.bf16.xpose.msra.mxu0 0
  %333 = vmatprep.subr.bf16.mxu0 0
  %334 = vmatpush1.bf16.xpose.msra.mxu0 0
  %335 = vmatprep.subr.bf16.mxu0 0
  %336 = vmatpush1.bf16.xpose.msra.mxu0 0
  %337 = vmatprep.subr.bf16.mxu0 0
  %338 = vmatpush1.bf16.xpose.msra.mxu0 0
  %339 = vmatprep.subr.bf16.mxu0 0
  %340 = vmatpush1.bf16.xpose.msra.mxu0 0
  %341 = vmatprep.subr.bf16.mxu0 0
  %342 = vmatpush1.bf16.xpose.msra.mxu0 0
  %343 = vmatprep.subr.bf16.mxu0 0
  %344 = vmatpush1.bf16.xpose.msra.mxu0 0
  %345 = vmatprep.subr.bf16.mxu0 0
  %346 = vmatpush1.bf16.xpose.msra.mxu0 0
  %347 = vmatprep.subr.bf16.mxu0 0
  %348 = vmatpush1.bf16.xpose.msra.mxu0 0
  %349 = vmatprep.subr.bf16.mxu0 0
  %350 = vmatpush1.bf16.xpose.msra.mxu0 0
  %351 = vmatprep.subr.bf16.mxu0 0
  %352 = vmatpush1.bf16.xpose.msra.mxu0 0
  %353 = vmatprep.subr.bf16.mxu0 0
  %354 = vmatpush1.bf16.xpose.msra.mxu0 0
  %355 = vmatprep.subr.bf16.mxu0 0
  %356 = vmatpush1.bf16.xpose.msra.mxu0 0
  %357 = vmatprep.subr.bf16.mxu0 0
  %358 = vmatpush1.bf16.xpose.msra.mxu0 0
  %359 = vmatprep.mubr.bf16.mxu0 0
  %360 = vmatmul.mubr.bf16.gmra.mrb[0].mxu0 %v322
  %v361 = vpop.f32.mrb[0].mxu0
  %v362 = vadd.f32 %v313, %v361
  %v363 = vpop.f32.mrb[0].mxu0
  %v364 = vpop.f32.mrb[0].mxu0
  %v365 = vpop.f32.mrb[0].mxu0
  %366 = vdwg.mxu0
  %v368 = vsel %vm320, %v297, 0
  %v371 = vsel %vm320, %v302, 0
  %373 = vmatprep.subr.bf16.mxu0 0
  %374 = vmatpush1.bf16.xpose.msra.mxu0 %v371
  %375 = vmatprep.subr.bf16.mxu0 0
  %376 = vmatpush1.bf16.xpose.msra.mxu0 0
  %377 = vmatprep.subr.bf16.mxu0 0
  %378 = vmatpush1.bf16.xpose.msra.mxu0 0
  %379 = vmatprep.subr.bf16.mxu0 0
  %380 = vmatpush1.bf16.xpose.msra.mxu0 0
  %381 = vmatprep.subr.bf16.mxu0 0
  %382 = vmatpush1.bf16.xpose.msra.mxu0 0
  %383 = vmatprep.subr.bf16.mxu0 0
  %384 = vmatpush1.bf16.xpose.msra.mxu0 0
  %385 = vmatprep.subr.bf16.mxu0 0
  %386 = vmatpush1.bf16.xpose.msra.mxu0 0
  %387 = vmatprep.subr.bf16.mxu0 0
  %388 = vmatpush1.bf16.xpose.msra.mxu0 0
  %389 = vmatprep.subr.bf16.mxu0 0
  %390 = vmatpush1.bf16.xpose.msra.mxu0 0
  %391 = vmatprep.subr.bf16.mxu0 0
  %392 = vmatpush1.bf16.xpose.msra.mxu0 0
  %393 = vmatprep.subr.bf16.mxu0 0
  %394 = vmatpush1.bf16.xpose.msra.mxu0 0
  %395 = vmatprep.subr.bf16.mxu0 0
  %396 = vmatpush1.bf16.xpose.msra.mxu0 0
  %397 = vmatprep.subr.bf16.mxu0 0
  %398 = vmatpush1.bf16.xpose.msra.mxu0 0
  %399 = vmatprep.subr.bf16.mxu0 0
  %400 = vmatpush1.bf16.xpose.msra.mxu0 0
  %401 = vmatprep.subr.bf16.mxu0 0
  %402 = vmatpush1.bf16.xpose.msra.mxu0 0
  %403 = vmatprep.subr.bf16.mxu0 0
  %404 = vmatpush1.bf16.xpose.msra.mxu0 0
  %405 = vmatprep.mubr.bf16.mxu0 0
  %406 = vmatmul.mubr.bf16.gmra.mrb[0].mxu0 %v368
  %v407 = vpop.f32.mrb[0].mxu0
  %v408 = vadd.f32 %v317, %v407
  %v409 = vpop.f32.mrb[0].mxu0
  %v410 = vpop.f32.mrb[0].mxu0
  %v411 = vpop.f32.mrb[0].mxu0
  %412 = vdwg.mxu0
  %v413 = vsel %vm320, %v362, -inf
  %414 = vmax.xlane.f32.xlu0 %v413
  %v415 = vpop.xlane.xlu0 %414
  %v416 = vsel %vm320, %v408, -inf
  %417 = vmax.xlane.f32.xlu0 %v416
  %v418 = vpop.xlane.xlu0 %417
  %v419 = vsub.f32 %v362, %v415
  %v420 = vsub.f32 %v408, %v418
  %v421 = vmul.f32 %v419, 1.442695
  %v422 = vpow.pop %v421
  %v423 = vmul.f32 %v420, 1.442695
  %v424 = vpow.pop %v423
  %v425 = vsel %vm320, %v422, 0.0
  %426 = vadd.xlane.f32.xlu0 %v425
  %v427 = vpop.xlane.xlu0 %426
  %v428 = vsel %vm320, %v424, 0.0
  %429 = vadd.xlane.f32.xlu0 %v428
  %v430 = vpop.xlane.xlu0 %429
  %v431 = vrcp.pop %v427
  %v432 = vrcp.pop %v430
  %v433 = vmul.f32 %v422, %v431
  %v434 = vmul.f32 %v424, %v432
  %v435 = vpack.c.bf16 %v433, %v433
  %v436 = vpack.c.bf16 %v434, %v434
  %v438 = vsel %vm320, %v435, 0
  %vm440 = vcmask 1043456
  %v442 = vsel %vm440, %v306, 0
  %444 = vmatprep.subr.bf16.mxu0 0
  %445 = vmatpush1.bf16.msra.mxu0 %v442
  %446 = vmatprep.subr.bf16.mxu0 0
  %447 = vmatpush1.bf16.msra.mxu0 0
  %448 = vmatprep.subr.bf16.mxu0 0
  %449 = vmatpush1.bf16.msra.mxu0 0
  %450 = vmatprep.subr.bf16.mxu0 0
  %451 = vmatpush1.bf16.msra.mxu0 0
  %452 = vmatprep.subr.bf16.mxu0 0
  %453 = vmatpush1.bf16.msra.mxu0 0
  %454 = vmatprep.subr.bf16.mxu0 0
  %455 = vmatpush1.bf16.msra.mxu0 0
  %456 = vmatprep.subr.bf16.mxu0 0
  %457 = vmatpush1.bf16.msra.mxu0 0
  %458 = vmatprep.subr.bf16.mxu0 0
  %459 = vmatpush1.bf16.msra.mxu0 0
  %460 = vmatprep.subr.bf16.mxu0 0
  %461 = vmatpush1.bf16.msra.mxu0 0
  %462 = vmatprep.subr.bf16.mxu0 0
  %463 = vmatpush1.bf16.msra.mxu0 0
  %464 = vmatprep.subr.bf16.mxu0 0
  %465 = vmatpush1.bf16.msra.mxu0 0
  %466 = vmatprep.subr.bf16.mxu0 0
  %467 = vmatpush1.bf16.msra.mxu0 0
  %468 = vmatprep.subr.bf16.mxu0 0
  %469 = vmatpush1.bf16.msra.mxu0 0
  %470 = vmatprep.subr.bf16.mxu0 0
  %471 = vmatpush1.bf16.msra.mxu0 0
  %472 = vmatprep.subr.bf16.mxu0 0
  %473 = vmatpush1.bf16.msra.mxu0 0
  %474 = vmatprep.subr.bf16.mxu0 0
  %475 = vmatpush1.bf16.msra.mxu0 0
  %476 = vmatprep.mubr.bf16.mxu0 0
  %477 = vmatmul.mubr.bf16.gmra.mrb[0].mxu0 %v438
  %v478 = vpop.f32.mrb[0].mxu0
  %v479 = vadd.f32 0.0, %v478
  %v480 = vpop.f32.mrb[0].mxu0
  %v481 = vpop.f32.mrb[0].mxu0
  %v482 = vpop.f32.mrb[0].mxu0
  %483 = vdwg.mxu0
  %v485 = vsel %vm320, %v436, 0
  %v488 = vsel %vm440, %v307, 0
  %490 = vmatprep.subr.bf16.mxu0 0
  %491 = vmatpush1.bf16.msra.mxu0 %v488
  %492 = vmatprep.subr.bf16.mxu0 0
  %493 = vmatpush1.bf16.msra.mxu0 0
  %494 = vmatprep.subr.bf16.mxu0 0
  %495 = vmatpush1.bf16.msra.mxu0 0
  %496 = vmatprep.subr.bf16.mxu0 0
  %497 = vmatpush1.bf16.msra.mxu0 0
  %498 = vmatprep.subr.bf16.mxu0 0
  %499 = vmatpush1.bf16.msra.mxu0 0
  %500 = vmatprep.subr.bf16.mxu0 0
  %501 = vmatpush1.bf16.msra.mxu0 0
  %502 = vmatprep.subr.bf16.mxu0 0
  %503 = vmatpush1.bf16.msra.mxu0 0
  %504 = vmatprep.subr.bf16.mxu0 0
  %505 = vmatpush1.bf16.msra.mxu0 0
  %506 = vmatprep.subr.bf16.mxu0 0
  %507 = vmatpush1.bf16.msra.mxu0 0
  %508 = vmatprep.subr.bf16.mxu0 0
  %509 = vmatpush1.bf16.msra.mxu0 0
  %510 = vmatprep.subr.bf16.mxu0 0
  %511 = vmatpush1.bf16.msra.mxu0 0
  %512 = vmatprep.subr.bf16.mxu0 0
  %513 = vmatpush1.bf16.msra.mxu0 0
  %514 = vmatprep.subr.bf16.mxu0 0
  %515 = vmatpush1.bf16.msra.mxu0 0
  %516 = vmatprep.subr.bf16.mxu0 0
  %517 = vmatpush1.bf16.msra.mxu0 0
  %518 = vmatprep.subr.bf16.mxu0 0
  %519 = vmatpush1.bf16.msra.mxu0 0
  %520 = vmatprep.subr.bf16.mxu0 0
  %521 = vmatpush1.bf16.msra.mxu0 0
  %522 = vmatprep.mubr.bf16.mxu0 0
  %523 = vmatmul.mubr.bf16.gmra.mrb[0].mxu0 %v485
  %v524 = vpop.f32.mrb[0].mxu0
  %v525 = vadd.f32 0.0, %v524
  %v526 = vpop.f32.mrb[0].mxu0
  %v527 = vpop.f32.mrb[0].mxu0
  %v528 = vpop.f32.mrb[0].mxu0
  %529 = vdwg.mxu0
  %v530 = vpack.c.bf16 %v525, %v479
  %531 = vst.msk [vmem:[#allocation2] sm:$0xff] %vm320, %v530
  %532 = vrot.lane.b32.xlu0 %v296, 120
  %v533 = vpop.permute.xlu0 %532
  %534 = vrot.lane.b32.xlu0 %v301, 120
  %v535 = vpop.permute.xlu0 %534
  %v537 = vsel %vm320, %v533, 0
  %v540 = vsel %vm320, %v535, 0
  %542 = vmatprep.subr.bf16.mxu0 0
  %543 = vmatpush1.bf16.xpose.msra.mxu0 %v540
  %544 = vmatprep.subr.bf16.mxu0 0
  %545 = vmatpush1.bf16.xpose.msra.mxu0 0
  %546 = vmatprep.subr.bf16.mxu0 0
  %547 = vmatpush1.bf16.xpose.msra.mxu0 0
  %548 = vmatprep.subr.bf16.mxu0 0
  %549 = vmatpush1.bf16.xpose.msra.mxu0 0
  %550 = vmatprep.subr.bf16.mxu0 0
  %551 = vmatpush1.bf16.xpose.msra.mxu0 0
  %552 = vmatprep.subr.bf16.mxu0 0
  %553 = vmatpush1.bf16.xpose.msra.mxu0 0
  %554 = vmatprep.subr.bf16.mxu0 0
  %555 = vmatpush1.bf16.xpose.msra.mxu0 0
  %556 = vmatprep.subr.bf16.mxu0 0
  %557 = vmatpush1.bf16.xpose.msra.mxu0 0
  %558 = vmatprep.subr.bf16.mxu0 0
  %559 = vmatpush1.bf16.xpose.msra.mxu0 0
  %560 = vmatprep.subr.bf16.mxu0 0
  %561 = vmatpush1.bf16.xpose.msra.mxu0 0
  %562 = vmatprep.subr.bf16.mxu0 0
  %563 = vmatpush1.bf16.xpose.msra.mxu0 0
  %564 = vmatprep.subr.bf16.mxu0 0
  %565 = vmatpush1.bf16.xpose.msra.mxu0 0
  %566 = vmatprep.subr.bf16.mxu0 0
  %567 = vmatpush1.bf16.xpose.msra.mxu0 0
  %568 = vmatprep.subr.bf16.mxu0 0
  %569 = vmatpush1.bf16.xpose.msra.mxu0 0
  %570 = vmatprep.subr.bf16.mxu0 0
  %571 = vmatpush1.bf16.xpose.msra.mxu0 0
  %572 = vmatprep.subr.bf16.mxu0 0
  %573 = vmatpush1.bf16.xpose.msra.mxu0 0
  %574 = vmatprep.mubr.bf16.mxu0 0
  %575 = vmatmul.mubr.bf16.gmra.mrb[0].mxu0 %v537
  %v576 = vpop.f32.mrb[0].mxu0
  %v577 = vadd.f32 %v313, %v576
  %v578 = vpop.f32.mrb[0].mxu0
  %v579 = vpop.f32.mrb[0].mxu0
  %v580 = vpop.f32.mrb[0].mxu0
  %581 = vdwg.mxu0
  %582 = vrot.lane.b32.xlu0 %v297, 120
  %v583 = vpop.permute.xlu0 %582
  %584 = vrot.lane.b32.xlu0 %v302, 120
  %v585 = vpop.permute.xlu0 %584
  %v587 = vsel %vm320, %v583, 0
  %v590 = vsel %vm320, %v585, 0
  %592 = vmatprep.subr.bf16.mxu0 0
  %593 = vmatpush1.bf16.xpose.msra.mxu0 %v590
  %594 = vmatprep.subr.bf16.mxu0 0
  %595 = vmatpush1.bf16.xpose.msra.mxu0 0
  %596 = vmatprep.subr.bf16.mxu0 0
  %597 = vmatpush1.bf16.xpose.msra.mxu0 0
  %598 = vmatprep.subr.bf16.mxu0 0
  %599 = vmatpush1.bf16.xpose.msra.mxu0 0
  %600 = vmatprep.subr.bf16.mxu0 0
  %601 = vmatpush1.bf16.xpose.msra.mxu0 0
  %602 = vmatprep.subr.bf16.mxu0 0
  %603 = vmatpush1.bf16.xpose.msra.mxu0 0
  %604 = vmatprep.subr.bf16.mxu0 0
  %605 = vmatpush1.bf16.xpose.msra.mxu0 0
  %606 = vmatprep.subr.bf16.mxu0 0
  %607 = vmatpush1.bf16.xpose.msra.mxu0 0
  %608 = vmatprep.subr.bf16.mxu0 0
  %609 = vmatpush1.bf16.xpose.msra.mxu0 0
  %610 = vmatprep.subr.bf16.mxu0 0
  %611 = vmatpush1.bf16.xpose.msra.mxu0 0
  %612 = vmatprep.subr.bf16.mxu0 0
  %613 = vmatpush1.bf16.xpose.msra.mxu0 0
  %614 = vmatprep.subr.bf16.mxu0 0
  %615 = vmatpush1.bf16.xpose.msra.mxu0 0
  %616 = vmatprep.subr.bf16.mxu0 0
  %617 = vmatpush1.bf16.xpose.msra.mxu0 0
  %618 = vmatprep.subr.bf16.mxu0 0
  %619 = vmatpush1.bf16.xpose.msra.mxu0 0
  %620 = vmatprep.subr.bf16.mxu0 0
  %621 = vmatpush1.bf16.xpose.msra.mxu0 0
  %622 = vmatprep.subr.bf16.mxu0 0
  %623 = vmatpush1.bf16.xpose.msra.mxu0 0
  %624 = vmatprep.mubr.bf16.mxu0 0
  %625 = vmatmul.mubr.bf16.gmra.mrb[0].mxu0 %v587
  %v626 = vpop.f32.mrb[0].mxu0
  %v627 = vadd.f32 %v317, %v626
  %v628 = vpop.f32.mrb[0].mxu0
  %v629 = vpop.f32.mrb[0].mxu0
  %v630 = vpop.f32.mrb[0].mxu0
  %631 = vdwg.mxu0
  %v632 = vsel %vm320, %v577, -inf
  %633 = vmax.xlane.f32.xlu0 %v632
  %v634 = vpop.xlane.xlu0 %633
  %v635 = vsel %vm320, %v627, -inf
  %636 = vmax.xlane.f32.xlu0 %v635
  %v637 = vpop.xlane.xlu0 %636
  %v638 = vsub.f32 %v577, %v634
  %v639 = vsub.f32 %v627, %v637
  %v640 = vmul.f32 %v638, 1.442695
  %v641 = vpow.pop %v640
  %v642 = vmul.f32 %v639, 1.442695
  %v643 = vpow.pop %v642
  %v644 = vsel %vm320, %v641, 0.0
  %645 = vadd.xlane.f32.xlu0 %v644
  %v646 = vpop.xlane.xlu0 %645
  %v647 = vsel %vm320, %v643, 0.0
  %648 = vadd.xlane.f32.xlu0 %v647
  %v649 = vpop.xlane.xlu0 %648
  %v650 = vrcp.pop %v646
  %v651 = vrcp.pop %v649
  %v652 = vmul.f32 %v641, %v650
  %v653 = vmul.f32 %v643, %v651
  %v654 = vpack.c.bf16 %v652, %v652
  %v655 = vpack.c.bf16 %v653, %v653
  %656 = vrot.lane.b32.xlu0 %v306, 120
  %v657 = vpop.permute.xlu0 %656
  %v659 = vsel %vm320, %v654, 0
  %v662 = vsel %vm440, %v657, 0
  %664 = vmatprep.subr.bf16.mxu0 0
  %665 = vmatpush1.bf16.msra.mxu0 %v662
  %666 = vmatprep.subr.bf16.mxu0 0
  %667 = vmatpush1.bf16.msra.mxu0 0
  %668 = vmatprep.subr.bf16.mxu0 0
  %669 = vmatpush1.bf16.msra.mxu0 0
  %670 = vmatprep.subr.bf16.mxu0 0
  %671 = vmatpush1.bf16.msra.mxu0 0
  %672 = vmatprep.subr.bf16.mxu0 0
  %673 = vmatpush1.bf16.msra.mxu0 0
  %674 = vmatprep.subr.bf16.mxu0 0
  %675 = vmatpush1.bf16.msra.mxu0 0
  %676 = vmatprep.subr.bf16.mxu0 0
  %677 = vmatpush1.bf16.msra.mxu0 0
  %678 = vmatprep.subr.bf16.mxu0 0
  %679 = vmatpush1.bf16.msra.mxu0 0
  %680 = vmatprep.subr.bf16.mxu0 0
  %681 = vmatpush1.bf16.msra.mxu0 0
  %682 = vmatprep.subr.bf16.mxu0 0
  %683 = vmatpush1.bf16.msra.mxu0 0
  %684 = vmatprep.subr.bf16.mxu0 0
  %685 = vmatpush1.bf16.msra.mxu0 0
  %686 = vmatprep.subr.bf16.mxu0 0
  %687 = vmatpush1.bf16.msra.mxu0 0
  %688 = vmatprep.subr.bf16.mxu0 0
  %689 = vmatpush1.bf16.msra.mxu0 0
  %690 = vmatprep.subr.bf16.mxu0 0
  %691 = vmatpush1.bf16.msra.mxu0 0
  %692 = vmatprep.subr.bf16.mxu0 0
  %693 = vmatpush1.bf16.msra.mxu0 0
  %694 = vmatprep.subr.bf16.mxu0 0
  %695 = vmatpush1.bf16.msra.mxu0 0
  %696 = vmatprep.mubr.bf16.mxu0 0
  %697 = vmatmul.mubr.bf16.gmra.mrb[0].mxu0 %v659
  %v698 = vpop.f32.mrb[0].mxu0
  %v699 = vadd.f32 0.0, %v698
  %v700 = vpop.f32.mrb[0].mxu0
  %v701 = vpop.f32.mrb[0].mxu0
  %v702 = vpop.f32.mrb[0].mxu0
  %703 = vdwg.mxu0
  %704 = vrot.lane.b32.xlu0 %v307, 120
  %v705 = vpop.permute.xlu0 %704
  %v707 = vsel %vm320, %v655, 0
  %v710 = vsel %vm440, %v705, 0
  %712 = vmatprep.subr.bf16.mxu0 0
  %713 = vmatpush1.bf16.msra.mxu0 %v710
  %714 = vmatprep.subr.bf16.mxu0 0
  %715 = vmatpush1.bf16.msra.mxu0 0
  %716 = vmatprep.subr.bf16.mxu0 0
  %717 = vmatpush1.bf16.msra.mxu0 0
  %718 = vmatprep.subr.bf16.mxu0 0
  %719 = vmatpush1.bf16.msra.mxu0 0
  %720 = vmatprep.subr.bf16.mxu0 0
  %721 = vmatpush1.bf16.msra.mxu0 0
  %722 = vmatprep.subr.bf16.mxu0 0
  %723 = vmatpush1.bf16.msra.mxu0 0
  %724 = vmatprep.subr.bf16.mxu0 0
  %725 = vmatpush1.bf16.msra.mxu0 0
  %726 = vmatprep.subr.bf16.mxu0 0
  %727 = vmatpush1.bf16.msra.mxu0 0
  %728 = vmatprep.subr.bf16.mxu0 0
  %729 = vmatpush1.bf16.msra.mxu0 0
  %730 = vmatprep.subr.bf16.mxu0 0
  %731 = vmatpush1.bf16.msra.mxu0 0
  %732 = vmatprep.subr.bf16.mxu0 0
  %733 = vmatpush1.bf16.msra.mxu0 0
  %734 = vmatprep.subr.bf16.mxu0 0
  %735 = vmatpush1.bf16.msra.mxu0 0
  %736 = vmatprep.subr.bf16.mxu0 0
  %737 = vmatpush1.bf16.msra.mxu0 0
  %738 = vmatprep.subr.bf16.mxu0 0
  %739 = vmatpush1.bf16.msra.mxu0 0
  %740 = vmatprep.subr.bf16.mxu0 0
  %741 = vmatpush1.bf16.msra.mxu0 0
  %742 = vmatprep.subr.bf16.mxu0 0
  %743 = vmatpush1.bf16.msra.mxu0 0
  %744 = vmatprep.mubr.bf16.mxu0 0
  %745 = vmatmul.mubr.bf16.gmra.mrb[0].mxu0 %v707
  %v746 = vpop.f32.mrb[0].mxu0
  %v747 = vadd.f32 0.0, %v746
  %v748 = vpop.f32.mrb[0].mxu0
  %v749 = vpop.f32.mrb[0].mxu0
  %v750 = vpop.f32.mrb[0].mxu0
  %751 = vdwg.mxu0
  %v752 = vpack.c.bf16 %v747, %v699
  %754 = vrot.lane.b32.xlu0 %v752, 8
  %v755 = vpop.permute.xlu0 %754
  %vm757 = vcmask 130112
  %758 = vst.msk [vmem:[#allocation2] sm:$0xff] %vm757, %v755
  %759 = vrot.lane.b32.xlu0 %v296, 112
  %v760 = vpop.permute.xlu0 %759
  %761 = vrot.lane.b32.xlu0 %v301, 112
  %v762 = vpop.permute.xlu0 %761
  %v764 = vsel %vm320, %v760, 0
  %v767 = vsel %vm320, %v762, 0
  %769 = vmatprep.subr.bf16.mxu0 0
  %770 = vmatpush1.bf16.xpose.msra.mxu0 %v767
  %771 = vmatprep.subr.bf16.mxu0 0
  %772 = vmatpush1.bf16.xpose.msra.mxu0 0
  %773 = vmatprep.subr.bf16.mxu0 0
  %774 = vmatpush1.bf16.xpose.msra.mxu0 0
  %775 = vmatprep.subr.bf16.mxu0 0
  %776 = vmatpush1.bf16.xpose.msra.mxu0 0
  %777 = vmatprep.subr.bf16.mxu0 0
  %778 = vmatpush1.bf16.xpose.msra.mxu0 0
  %779 = vmatprep.subr.bf16.mxu0 0
  %780 = vmatpush1.bf16.xpose.msra.mxu0 0
  %781 = vmatprep.subr.bf16.mxu0 0
  %782 = vmatpush1.bf16.xpose.msra.mxu0 0
  %783 = vmatprep.subr.bf16.mxu0 0
  %784 = vmatpush1.bf16.xpose.msra.mxu0 0
  %785 = vmatprep.subr.bf16.mxu0 0
  %786 = vmatpush1.bf16.xpose.msra.mxu0 0
  %787 = vmatprep.subr.bf16.mxu0 0
  %788 = vmatpush1.bf16.xpose.msra.mxu0 0
  %789 = vmatprep.subr.bf16.mxu0 0
  %790 = vmatpush1.bf16.xpose.msra.mxu0 0
  %791 = vmatprep.subr.bf16.mxu0 0
  %792 = vmatpush1.bf16.xpose.msra.mxu0 0
  %793 = vmatprep.subr.bf16.mxu0 0
  %794 = vmatpush1.bf16.xpose.msra.mxu0 0
  %795 = vmatprep.subr.bf16.mxu0 0
  %796 = vmatpush1.bf16.xpose.msra.mxu0 0
  %797 = vmatprep.subr.bf16.mxu0 0
  %798 = vmatpush1.bf16.xpose.msra.mxu0 0
  %799 = vmatprep.subr.bf16.mxu0 0
  %800 = vmatpush1.bf16.xpose.msra.mxu0 0
  %801 = vmatprep.mubr.bf16.mxu0 0
  %802 = vmatmul.mubr.bf16.gmra.mrb[0].mxu0 %v764
  %v803 = vpop.f32.mrb[0].mxu0
  %v804 = vadd.f32 %v313, %v803
  %v805 = vpop.f32.mrb[0].mxu0
  %v806 = vpop.f32.mrb[0].mxu0
  %v807 = vpop.f32.mrb[0].mxu0
  %808 = vdwg.mxu0
  %809 = vrot.lane.b32.xlu0 %v297, 112
  %v810 = vpop.permute.xlu0 %809
  %811 = vrot.lane.b32.xlu0 %v302, 112
  %v812 = vpop.permute.xlu0 %811
  %v814 = vsel %vm320, %v810, 0
  %v817 = vsel %vm320, %v812, 0
  %819 = vmatprep.subr.bf16.mxu0 0
  %820 = vmatpush1.bf16.xpose.msra.mxu0 %v817
  %821 = vmatprep.subr.bf16.mxu0 0
  %822 = vmatpush1.bf16.xpose.msra.mxu0 0
  %823 = vmatprep.subr.bf16.mxu0 0
  %824 = vmatpush1.bf16.xpose.msra.mxu0 0
  %825 = vmatprep.subr.bf16.mxu0 0
  %826 = vmatpush1.bf16.xpose.msra.mxu0 0
  %827 = vmatprep.subr.bf16.mxu0 0
  %828 = vmatpush1.bf16.xpose.msra.mxu0 0
  %829 = vmatprep.subr.bf16.mxu0 0
  %830 = vmatpush1.bf16.xpose.msra.mxu0 0
  %831 = vmatprep.subr.bf16.mxu0 0
  %832 = vmatpush1.bf16.xpose.msra.mxu0 0
  %833 = vmatprep.subr.bf16.mxu0 0
  %834 = vmatpush1.bf16.xpose.msra.mxu0 0
  %835 = vmatprep.subr.bf16.mxu0 0
  %836 = vmatpush1.bf16.xpose.msra.mxu0 0
  %837 = vmatprep.subr.bf16.mxu0 0
  %838 = vmatpush1.bf16.xpose.msra.mxu0 0
  %839 = vmatprep.subr.bf16.mxu0 0
  %840 = vmatpush1.bf16.xpose.msra.mxu0 0
  %841 = vmatprep.subr.bf16.mxu0 0
  %842 = vmatpush1.bf16.xpose.msra.mxu0 0
  %843 = vmatprep.subr.bf16.mxu0 0
  %844 = vmatpush1.bf16.xpose.msra.mxu0 0
  %845 = vmatprep.subr.bf16.mxu0 0
  %846 = vmatpush1.bf16.xpose.msra.mxu0 0
  %847 = vmatprep.subr.bf16.mxu0 0
  %848 = vmatpush1.bf16.xpose.msra.mxu0 0
  %849 = vmatprep.subr.bf16.mxu0 0
  %850 = vmatpush1.bf16.xpose.msra.mxu0 0
  %851 = vmatprep.mubr.bf16.mxu0 0
  %852 = vmatmul.mubr.bf16.gmra.mrb[0].mxu0 %v814
  %v853 = vpop.f32.mrb[0].mxu0
  %v854 = vadd.f32 %v317, %v853
  %v855 = vpop.f32.mrb[0].mxu0
  %v856 = vpop.f32.mrb[0].mxu0
  %v857 = vpop.f32.mrb[0].mxu0
  %858 = vdwg.mxu0
  %v859 = vsel %vm320, %v804, -inf
  %860 = vmax.xlane.f32.xlu0 %v859
  %v861 = vpop.xlane.xlu0 %860
  %v862 = vsel %vm320, %v854, -inf
  %863 = vmax.xlane.f32.xlu0 %v862
  %v864 = vpop.xlane.xlu0 %863
  %v865 = vsub.f32 %v804, %v861
  %v866 = vsub.f32 %v854, %v864
  %v867 = vmul.f32 %v865, 1.442695
  %v868 = vpow.pop %v867
  %v869 = vmul.f32 %v866, 1.442695
  %v870 = vpow.pop %v869
  %v871 = vsel %vm320, %v868, 0.0
  %872 = vadd.xlane.f32.xlu0 %v871
  %v873 = vpop.xlane.xlu0 %872
  %v874 = vsel %vm320, %v870, 0.0
  %875 = vadd.xlane.f32.xlu0 %v874
  %v876 = vpop.xlane.xlu0 %875
  %v877 = vrcp.pop %v873
  %v878 = vrcp.pop %v876
  %v879 = vmul.f32 %v868, %v877
  %v880 = vmul.f32 %v870, %v878
  %v881 = vpack.c.bf16 %v879, %v879
  %v882 = vpack.c.bf16 %v880, %v880
  %883 = vrot.lane.b32.xlu0 %v306, 112
  %v884 = vpop.permute.xlu0 %883
  %v886 = vsel %vm320, %v881, 0
  %v889 = vsel %vm440, %v884, 0
  %891 = vmatprep.subr.bf16.mxu0 0
  %892 = vmatpush1.bf16.msra.mxu0 %v889
  %893 = vmatprep.subr.bf16.mxu0 0
  %894 = vmatpush1.bf16.msra.mxu0 0
  %895 = vmatprep.subr.bf16.mxu0 0
  %896 = vmatpush1.bf16.msra.mxu0 0
  %897 = vmatprep.subr.bf16.mxu0 0
  %898 = vmatpush1.bf16.msra.mxu0 0
  %899 = vmatprep.subr.bf16.mxu0 0
  %900 = vmatpush1.bf16.msra.mxu0 0
  %901 = vmatprep.subr.bf16.mxu0 0
  %902 = vmatpush1.bf16.msra.mxu0 0
  %903 = vmatprep.subr.bf16.mxu0 0
  %904 = vmatpush1.bf16.msra.mxu0 0
  %905 = vmatprep.subr.bf16.mxu0 0
  %906 = vmatpush1.bf16.msra.mxu0 0
  %907 = vmatprep.subr.bf16.mxu0 0
  %908 = vmatpush1.bf16.msra.mxu0 0
  %909 = vmatprep.subr.bf16.mxu0 0
  %910 = vmatpush1.bf16.msra.mxu0 0
  %911 = vmatprep.subr.bf16.mxu0 0
  %912 = vmatpush1.bf16.msra.mxu0 0
  %913 = vmatprep.subr.bf16.mxu0 0
  %914 = vmatpush1.bf16.msra.mxu0 0
  %915 = vmatprep.subr.bf16.mxu0 0
  %916 = vmatpush1.bf16.msra.mxu0 0
  %917 = vmatprep.subr.bf16.mxu0 0
  %918 = vmatpush1.bf16.msra.mxu0 0
  %919 = vmatprep.subr.bf16.mxu0 0
  %920 = vmatpush1.bf16.msra.mxu0 0
  %921 = vmatprep.subr.bf16.mxu0 0
  %922 = vmatpush1.bf16.msra.mxu0 0
  %923 = vmatprep.mubr.bf16.mxu0 0
  %924 = vmatmul.mubr.bf16.gmra.mrb[0].mxu0 %v886
  %v925 = vpop.f32.mrb[0].mxu0
  %v926 = vadd.f32 0.0, %v925
  %v927 = vpop.f32.mrb[0].mxu0
  %v928 = vpop.f32.mrb[0].mxu0
  %v929 = vpop.f32.mrb[0].mxu0
  %930 = vdwg.mxu0
  %931 = vrot.lane.b32.xlu0 %v307, 112
  %v932 = vpop.permute.xlu0 %931
  %v934 = vsel %vm320, %v882, 0
  %v937 = vsel %vm440, %v932, 0
  %939 = vmatprep.subr.bf16.mxu0 0
  %940 = vmatpush1.bf16.msra.mxu0 %v937
  %941 = vmatprep.subr.bf16.mxu0 0
  %942 = vmatpush1.bf16.msra.mxu0 0
  %943 = vmatprep.subr.bf16.mxu0 0
  %944 = vmatpush1.bf16.msra.mxu0 0
  %945 = vmatprep.subr.bf16.mxu0 0
  %946 = vmatpush1.bf16.msra.mxu0 0
  %947 = vmatprep.subr.bf16.mxu0 0
  %948 = vmatpush1.bf16.msra.mxu0 0
  %949 = vmatprep.subr.bf16.mxu0 0
  %950 = vmatpush1.bf16.msra.mxu0 0
  %951 = vmatprep.subr.bf16.mxu0 0
  %952 = vmatpush1.bf16.msra.mxu0 0
  %953 = vmatprep.subr.bf16.mxu0 0
  %954 = vmatpush1.bf16.msra.mxu0 0
  %955 = vmatprep.subr.bf16.mxu0 0
  %956 = vmatpush1.bf16.msra.mxu0 0
  %957 = vmatprep.subr.bf16.mxu0 0
  %958 = vmatpush1.bf16.msra.mxu0 0
  %959 = vmatprep.subr.bf16.mxu0 0
  %960 = vmatpush1.bf16.msra.mxu0 0
  %961 = vmatprep.subr.bf16.mxu0 0
  %962 = vmatpush1.bf16.msra.mxu0 0
  %963 = vmatprep.subr.bf16.mxu0 0
  %964 = vmatpush1.bf16.msra.mxu0 0
  %965 = vmatprep.subr.bf16.mxu0 0
  %966 = vmatpush1.bf16.msra.mxu0 0
  %967 = vmatprep.subr.bf16.mxu0 0
  %968 = vmatpush1.bf16.msra.mxu0 0
  %969 = vmatprep.subr.bf16.mxu0 0
  %970 = vmatpush1.bf16.msra.mxu0 0
  %971 = vmatprep.mubr.bf16.mxu0 0
  %972 = vmatmul.mubr.bf16.gmra.mrb[0].mxu0 %v934
  %v973 = vpop.f32.mrb[0].mxu0
  %v974 = vadd.f32 0.0, %v973
  %v975 = vpop.f32.mrb[0].mxu0
  %v976 = vpop.f32.mrb[0].mxu0
  %v977 = vpop.f32.mrb[0].mxu0
  %978 = vdwg.mxu0
  %v979 = vpack.c.bf16 %v974, %v926
  %981 = vrot.lane.b32.xlu0 %v979, 16
  %v982 = vpop.permute.xlu0 %981
  %vm984 = vcmask 195712
  %985 = vst.msk [vmem:[#allocation2] sm:$0xff] %vm984, %v982
  %986 = vrot.lane.b32.xlu0 %v296, 104
  %v987 = vpop.permute.xlu0 %986
  %988 = vrot.lane.b32.xlu0 %v301, 104
  %v989 = vpop.permute.xlu0 %988
  %v991 = vsel %vm320, %v987, 0
  %v994 = vsel %vm320, %v989, 0
  %996 = vmatprep.subr.bf16.mxu0 0
  %997 = vmatpush1.bf16.xpose.msra.mxu0 %v994
  %998 = vmatprep.subr.bf16.mxu0 0
  %999 = vmatpush1.bf16.xpose.msra.mxu0 0
  %1000 = vmatprep.subr.bf16.mxu0 0
  %1001 = vmatpush1.bf16.xpose.msra.mxu0 0
  %1002 = vmatprep.subr.bf16.mxu0 0
  %1003 = vmatpush1.bf16.xpose.msra.mxu0 0
  %1004 = vmatprep.subr.bf16.mxu0 0
  %1005 = vmatpush1.bf16.xpose.msra.mxu0 0
  %1006 = vmatprep.subr.bf16.mxu0 0
  %1007 = vmatpush1.bf16.xpose.msra.mxu0 0
  %1008 = vmatprep.subr.bf16.mxu0 0
  %1009 = vmatpush1.bf16.xpose.msra.mxu0 0
  %1010 = vmatprep.subr.bf16.mxu0 0
  %1011 = vmatpush1.bf16.xpose.msra.mxu0 0
  %1012 = vmatprep.subr.bf16.mxu0 0
  %1013 = vmatpush1.bf16.xpose.msra.mxu0 0
  %1014 = vmatprep.subr.bf16.mxu0 0
  %1015 = vmatpush1.bf16.xpose.msra.mxu0 0
  %1016 = vmatprep.subr.bf16.mxu0 0
  %1017 = vmatpush1.bf16.xpose.msra.mxu0 0
  %1018 = vmatprep.subr.bf16.mxu0 0
  %1019 = vmatpush1.bf16.xpose.msra.mxu0 0
  %1020 = vmatprep.subr.bf16.mxu0 0
  %1021 = vmatpush1.bf16.xpose.msra.mxu0 0
  %1022 = vmatprep.subr.bf16.mxu0 0
  %1023 = vmatpush1.bf16.xpose.msra.mxu0 0
  %1024 = vmatprep.subr.bf16.mxu0 0
  %1025 = vmatpush1.bf16.xpose.msra.mxu0 0
  %1026 = vmatprep.subr.bf16.mxu0 0
  %1027 = vmatpush1.bf16.xpose.msra.mxu0 0
  %1028 = vmatprep.mubr.bf16.mxu0 0
  %1029 = vmatmul.mubr.bf16.gmra.mrb[0].mxu0 %v991
  %v1030 = vpop.f32.mrb[0].mxu0
  %v1031 = vadd.f32 %v313, %v1030
  %v1032 = vpop.f32.mrb[0].mxu0
  %v1033 = vpop.f32.mrb[0].mxu0
  %v1034 = vpop.f32.mrb[0].mxu0
  %1035 = vdwg.mxu0
  %1036 = vrot.lane.b32.xlu0 %v297, 104
  %v1037 = vpop.permute.xlu0 %1036
  %1038 = vrot.lane.b32.xlu0 %v302, 104
  %v1039 = vpop.permute.xlu0 %1038
  %v1041 = vsel %vm320, %v1037, 0
  %v1044 = vsel %vm320, %v1039, 0
  %1046 = vmatprep.subr.bf16.mxu0 0
  %1047 = vmatpush1.bf16.xpose.msra.mxu0 %v1044
  %1048 = vmatprep.subr.bf16.mxu0 0
  %1049 = vmatpush1.bf16.xpose.msra.mxu0 0
  %1050 = vmatprep.subr.bf16.mxu0 0
  %1051 = vmatpush1.bf16.xpose.msra.mxu0 0
  %1052 = vmatprep.subr.bf16.mxu0 0
  %1053 = vmatpush1.bf16.xpose.msra.mxu0 0
  %1054 = vmatprep.subr.bf16.mxu0 0
  %1055 = vmatpush1.bf16.xpose.msra.mxu0 0
  %1056 = vmatprep.subr.bf16.mxu0 0
  %1057 = vmatpush1.bf16.xpose.msra.mxu0 0
  %1058 = vmatprep.subr.bf16.mxu0 0
  %1059 = vmatpush1.bf16.xpose.msra.mxu0 0
  %1060 = vmatprep.subr.bf16.mxu0 0
  %1061 = vmatpush1.bf16.xpose.msra.mxu0 0
  %1062 = vmatprep.subr.bf16.mxu0 0
  %1063 = vmatpush1.bf16.xpose.msra.mxu0 0
  %1064 = vmatprep.subr.bf16.mxu0 0
  %1065 = vmatpush1.bf16.xpose.msra.mxu0 0
  %1066 = vmatprep.subr.bf16.mxu0 0
  %1067 = vmatpush1.bf16.xpose.msra.mxu0 0
  %1068 = vmatprep.subr.bf16.mxu0 0
  %1069 = vmatpush1.bf16.xpose.msra.mxu0 0
  %1070 = vmatprep.subr.bf16.mxu0 0
  %1071 = vmatpush1.bf16.xpose.msra.mxu0 0
  %1072 = vmatprep.subr.bf16.mxu0 0
  %1073 = vmatpush1.bf16.xpose.msra.mxu0 0
  %1074 = vmatprep.subr.bf16.mxu0 0
  %1075 = vmatpush1.bf16.xpose.msra.mxu0 0
  %1076 = vmatprep.subr.bf16.mxu0 0
  %1077 = vmatpush1.bf16.xpose.msra.mxu0 0
  %1078 = vmatprep.mubr.bf16.mxu0 0
  %1079 = vmatmul.mubr.bf16.gmra.mrb[0].mxu0 %v1041
  %v1080 = vpop.f32.mrb[0].mxu0
  %v1081 = vadd.f32 %v317, %v1080
  %v1082 = vpop.f32.mrb[0].mxu0
  %v1083 = vpop.f32.mrb[0].mxu0
  %v1084 = vpop.f32.mrb[0].mxu0
  %1085 = vdwg.mxu0
  %v1086 = vsel %vm320, %v1031, -inf
  %1087 = vmax.xlane.f32.xlu0 %v1086
  %v1088 = vpop.xlane.xlu0 %1087
  %v1089 = vsel %vm320, %v1081, -inf
  %1090 = vmax.xlane.f32.xlu0 %v1089
  %v1091 = vpop.xlane.xlu0 %1090
  %v1092 = vsub.f32 %v1031, %v1088
  %v1093 = vsub.f32 %v1081, %v1091
  %v1094 = vmul.f32 %v1092, 1.442695
  %v1095 = vpow.pop %v1094
  %v1096 = vmul.f32 %v1093, 1.442695
  %v1097 = vpow.pop %v1096
  %v1098 = vsel %vm320, %v1095, 0.0
  %1099 = vadd.xlane.f32.xlu0 %v1098
  %v1100 = vpop.xlane.xlu0 %1099
  %v1101 = vsel %vm320, %v1097, 0.0
  %1102 = vadd.xlane.f32.xlu0 %v1101
  %v1103 = vpop.xlane.xlu0 %1102
  %v1104 = vrcp.pop %v1100
  %v1105 = vrcp.pop %v1103
  %v1106 = vmul.f32 %v1095, %v1104
  %v1107 = vmul.f32 %v1097, %v1105
  %v1108 = vpack.c.bf16 %v1106, %v1106
  %v1109 = vpack.c.bf16 %v1107, %v1107
  %1110 = vrot.lane.b32.xlu0 %v306, 104
  %v1111 = vpop.permute.xlu0 %1110
  %v1113 = vsel %vm320, %v1108, 0
  %v1116 = vsel %vm440, %v1111, 0
  %1118 = vmatprep.subr.bf16.mxu0 0
  %1119 = vmatpush1.bf16.msra.mxu0 %v1116
  %1120 = vmatprep.subr.bf16.mxu0 0
  %1121 = vmatpush1.bf16.msra.mxu0 0
  %1122 = vmatprep.subr.bf16.mxu0 0
  %1123 = vmatpush1.bf16.msra.mxu0 0
  %1124 = vmatprep.subr.bf16.mxu0 0
  %1125 = vmatpush1.bf16.msra.mxu0 0
  %1126 = vmatprep.subr.bf16.mxu0 0
  %1127 = vmatpush1.bf16.msra.mxu0 0
  %1128 = vmatprep.subr.bf16.mxu0 0
  %1129 = vmatpush1.bf16.msra.mxu0 0
  %1130 = vmatprep.subr.bf16.mxu0 0
  %1131 = vmatpush1.bf16.msra.mxu0 0
  %1132 = vmatprep.subr.bf16.mxu0 0
  %1133 = vmatpush1.bf16.msra.mxu0 0
  %1134 = vmatprep.subr.bf16.mxu0 0
  %1135 = vmatpush1.bf16.msra.mxu0 0
  %1136 = vmatprep.subr.bf16.mxu0 0
  %1137 = vmatpush1.bf16.msra.mxu0 0
  %1138 = vmatprep.subr.bf16.mxu0 0
  %1139 = vmatpush1.bf16.msra.mxu0 0
  %1140 = vmatprep.subr.bf16.mxu0 0
  %1141 = vmatpush1.bf16.msra.mxu0 0
  %1142 = vmatprep.subr.bf16.mxu0 0
  %1143 = vmatpush1.bf16.msra.mxu0 0
  %1144 = vmatprep.subr.bf16.mxu0 0
  %1145 = vmatpush1.bf16.msra.mxu0 0
  %1146 = vmatprep.subr.bf16.mxu0 0
  %1147 = vmatpush1.bf16.msra.mxu0 0
  %1148 = vmatprep.subr.bf16.mxu0 0
  %1149 = vmatpush1.bf16.msra.mxu0 0
  %1150 = vmatprep.mubr.bf16.mxu0 0
  %1151 = vmatmul.mubr.bf16.gmra.mrb[0].mxu0 %v1113
  %v1152 = vpop.f32.mrb[0].mxu0
  %v1153 = vadd.f32 0.0, %v1152
  %v1154 = vpop.f32.mrb[0].mxu0
  %v1155 = vpop.f32.mrb[0].mxu0
  %v1156 = vpop.f32.mrb[0].mxu0
  %1157 = vdwg.mxu0
  %1158 = vrot.lane.b32.xlu0 %v307, 104
  %v1159 = vpop.permute.xlu0 %1158
  %v1161 = vsel %vm320, %v1109, 0
  %v1164 = vsel %vm440, %v1159, 0
  %1166 = vmatprep.subr.bf16.mxu0 0
  %1167 = vmatpush1.bf16.msra.mxu0 %v1164
  %1168 = vmatprep.subr.bf16.mxu0 0
  %1169 = vmatpush1.bf16.msra.mxu0 0
  %1170 = vmatprep.subr.bf16.mxu0 0
  %1171 = vmatpush1.bf16.msra.mxu0 0
  %1172 = vmatprep.subr.bf16.mxu0 0
  %1173 = vmatpush1.bf16.msra.mxu0 0
  %1174 = vmatprep.subr.bf16.mxu0 0
  %1175 = vmatpush1.bf16.msra.mxu0 0
  %1176 = vmatprep.subr.bf16.mxu0 0
  %1177 = vmatpush1.bf16.msra.mxu0 0
  %1178 = vmatprep.subr.bf16.mxu0 0
  %1179 = vmatpush1.bf16.msra.mxu0 0
  %1180 = vmatprep.subr.bf16.mxu0 0
  %1181 = vmatpush1.bf16.msra.mxu0 0
  %1182 = vmatprep.subr.bf16.mxu0 0
  %1183 = vmatpush1.bf16.msra.mxu0 0
  %1184 = vmatprep.subr.bf16.mxu0 0
  %1185 = vmatpush1.bf16.msra.mxu0 0
  %1186 = vmatprep.subr.bf16.mxu0 0
  %1187 = vmatpush1.bf16.msra.mxu0 0
  %1188 = vmatprep.subr.bf16.mxu0 0
  %1189 = vmatpush1.bf16.msra.mxu0 0
  %1190 = vmatprep.subr.bf16.mxu0 0
  %1191 = vmatpush1.bf16.msra.mxu0 0
  %1192 = vmatprep.subr.bf16.mxu0 0
  %1193 = vmatpush1.bf16.msra.mxu0 0
  %1194 = vmatprep.subr.bf16.mxu0 0
  %1195 = vmatpush1.bf16.msra.mxu0 0
  %1196 = vmatprep.subr.bf16.mxu0 0
  %1197 = vmatpush1.bf16.msra.mxu0 0
  %1198 = vmatprep.mubr.bf16.mxu0 0
  %1199 = vmatmul.mubr.bf16.gmra.mrb[0].mxu0 %v1161
  %v1200 = vpop.f32.mrb[0].mxu0
  %v1201 = vadd.f32 0.0, %v1200
  %v1202 = vpop.f32.mrb[0].mxu0
  %v1203 = vpop.f32.mrb[0].mxu0
  %v1204 = vpop.f32.mrb[0].mxu0
  %1205 = vdwg.mxu0
  %v1206 = vpack.c.bf16 %v1201, %v1153
  %1208 = vrot.lane.b32.xlu0 %v1206, 24
  %v1209 = vpop.permute.xlu0 %1208
  %vm1211 = vcmask 261312
  %1212 = vst.msk [vmem:[#allocation2] sm:$0xff] %vm1211, %v1209
  %v1213 = vld [vmem:[#allocation2] sm:$0xff]
  %v1214 = vld [vmem:[%s10] sm:$0xf]
  %v1215 = vld [vmem:[%s10 + $0x4] sm:$0xf]
  %v1216 = vld [vmem:[%s10 + $0x8] sm:$0xf]
  %v1217 = vld [vmem:[%s10 + $0xc] sm:$0xf]
  %v1218 = vld [vmem:[%s11] sm:$0x1]
  %v1220 = vlaneseq
  %v1221 = vshrl.u32 %v1220, 7
  %v1222 = vsub.s32 0, %v1221
  %v1223 = vrot.slane %v1218, %v1222
  %v1229 = vunpack.c.l.b16 %v1214
  %v1230 = vunpack.c.l.b16 %v1215
  %v1231 = vunpack.c.l.b16 %v1216
  %v1232 = vunpack.c.l.b16 %v1217
  %v1233 = vpack.c.b16 %v1230, %v1229
  %v1234 = vpack.c.b16 %v1232, %v1231
  %v1238 = vsel %vm46, %v1213, 0
  %1240 = vmatprep.subr.bf16.mxu0 0
  %1241 = vmatpush1.bf16.msra.mxu0 %v1233
  %1242 = vmatprep.subr.bf16.mxu0 0
  %1243 = vmatpush1.bf16.msra.mxu0 %v1234
  %1244 = vmatprep.subr.bf16.mxu0 0
  %1245 = vmatpush1.bf16.msra.mxu0 0
  %1246 = vmatprep.subr.bf16.mxu0 0
  %1247 = vmatpush1.bf16.msra.mxu0 0
  %1248 = vmatprep.subr.bf16.mxu0 0
  %1249 = vmatpush1.bf16.msra.mxu0 0
  %1250 = vmatprep.subr.bf16.mxu0 0
  %1251 = vmatpush1.bf16.msra.mxu0 0
  %1252 = vmatprep.subr.bf16.mxu0 0
  %1253 = vmatpush1.bf16.msra.mxu0 0
  %1254 = vmatprep.subr.bf16.mxu0 0
  %1255 = vmatpush1.bf16.msra.mxu0 0
  %1256 = vmatprep.subr.bf16.mxu0 0
  %1257 = vmatpush1.bf16.msra.mxu0 0
  %1258 = vmatprep.subr.bf16.mxu0 0
  %1259 = vmatpush1.bf16.msra.mxu0 0
  %1260 = vmatprep.subr.bf16.mxu0 0
  %1261 = vmatpush1.bf16.msra.mxu0 0
  %1262 = vmatprep.subr.bf16.mxu0 0
  %1263 = vmatpush1.bf16.msra.mxu0 0
  %1264 = vmatprep.subr.bf16.mxu0 0
  %1265 = vmatpush1.bf16.msra.mxu0 0
  %1266 = vmatprep.subr.bf16.mxu0 0
  %1267 = vmatpush1.bf16.msra.mxu0 0
  %1268 = vmatprep.subr.bf16.mxu0 0
  %1269 = vmatpush1.bf16.msra.mxu0 0
  %1270 = vmatprep.subr.bf16.mxu0 0
  %1271 = vmatpush1.bf16.msra.mxu0 0
  %1272 = vmatprep.mubr.bf16.mxu0 0
  %1273 = vmatmul.mubr.bf16.gmra.mrb[0].mxu0 %v1238
  %v1274 = vpop.f32.mrb[0].mxu0
  %v1275 = vadd.f32 %v1223, %v1274
  %v1276 = vpop.f32.mrb[0].mxu0
  %v1277 = vpop.f32.mrb[0].mxu0
  %v1278 = vadd.f32 %v1223, %v1277
  %v1279 = vpop.f32.mrb[0].mxu0
  %1280 = vdwg.mxu0
  %v1281 = vadd.f32 %v42, %v1275
  %v1282 = vadd.f32 %v43, %v1278
  %1283 = vst.msk [vmem:[%s12] sm:$0xff] %vm46, %v1281
  %1284 = vst.msk [vmem:[%s12 + $0x8] sm:$0xff] %vm46, %v1282
  // Predicated region
  $region50: #{bert_forward.4} parent=0 // pred_check
    _
  $region51: #{bert_forward.4} parent=0 // pred_check_branch
    %1286 = sbr.rel (0) target = $region53
  $region52: #{bert_forward.4} parent=0 // pred_region
    _
  $region53: #{bert_forward.4} parent=0 // pred_fallthru
    _
  // Predicated region
  $region54: #{bert_forward.4} parent=0 // pred_check
    _
  $region55: #{bert_forward.4} parent=0 // pred_check_branch
    %1288 = sbr.rel (0) target = $region57
  $region56: #{bert_forward.4} parent=0 // pred_region
    _
  $region57: #{bert_forward.4} parent=0 // pred_fallthru
    _

</llo_original>
